<compile_context>
chip_gen: v5e
topology: v5e:2x2
jax: 0.10.0
libtpu: 0.0.40
codegen_flags: <defaults>
</compile_context>

<pallas_src>
import functools

import jax
import jax.numpy as jnp
from jax import lax
from jax.experimental import pallas as pl
from jax.experimental.pallas import tpu as pltpu


# ---------------------------------------------------------------------------
# Kernel
# ---------------------------------------------------------------------------
def _xattn_kernel(tgt_ref, pos_ref, src_ref, bias_ref,
                  gnw_ref, gnb_ref, lnw_ref, lnb_ref,
                  wq_ref, wk_ref, wv_ref, wo_ref, gain_ref,
                  out_ref, *, heads, head_dim, block_b, compute_dtype):
    eps = 1e-5
    scale = head_dim ** -0.5
    C, HW = tgt_ref.shape[1], tgt_ref.shape[2]
    T = src_ref.shape[2]
    g = gain_ref[0]                                   # effective gain (SMEM scalar)

    # Loop-invariant loads, hoisted once per grid step.
    pos = pos_ref[0]                                  # (C, HW)
    gnw = gnw_ref[...]                                # (C, 1)
    gnb = gnb_ref[...]                                # (C, 1)
    lnw = lnw_ref[...]                                # (1, T)
    lnb = lnb_ref[...]                                # (1, T)
    wq = wq_ref[...]                                  # (QKV, C)  torch (out,in), compute_dtype
    wk = wk_ref[...]                                  # (QKV, T)
    wv = wv_ref[...]                                  # (QKV, T)
    wo = wo_ref[...]                                  # (C, QKV)

    nn_d = (((1,), (0,)), ((), ()))    # A(M,K) @ B(K,N)
    nt_d = (((1,), (1,)), ((), ()))    # A(M,K) @ B(N,K)^T
    tn_d = (((0,), (0,)), ((), ()))    # A(K,M)^T @ B(K,N)

    def one_sample(b):
        x = tgt_ref[b]                                # (C, HW) original (residual)

        # --- GroupNorm(num_groups=1): single-pass stats over all (C, HW) ---
        # TODO(synk): if activations can have |mean| >> std, use the two-pass
        # form to avoid E[x^2] - mu^2 cancellation.
        inv_n = 1.0 / (C * HW)
        mean = jnp.sum(x) * inv_n
        msq = jnp.sum(x * x) * inv_n
        var = msq - mean * mean
        xn = (x - mean) * lax.rsqrt(var + eps)
        xn = xn * gnw + gnb

        # --- +pos emb; fold the softmax 1/sqrt(head_dim) scale in once ---
        q_in = ((xn + pos) * scale).astype(compute_dtype)             # (C, HW)
        q_t = lax.dot_general(wq, q_in, nn_d,
                              preferred_element_type=jnp.float32)     # (QKV, HW)

        # --- LayerNorm on src over text_dim (single-pass stats) ---
        s_in = src_ref[b]                                             # (S, T)
        inv_t = 1.0 / T
        mu = jnp.sum(s_in, axis=-1, keepdims=True) * inv_t
        m2 = jnp.sum(s_in * s_in, axis=-1, keepdims=True) * inv_t
        sv = m2 - mu * mu
        sn = ((s_in - mu) * lax.rsqrt(sv + eps) * lnw + lnb).astype(compute_dtype)

        # k and v both feature-major (QKV, S): per-head slices are sublane slices.
        k_t = lax.dot_general(wk, sn, nt_d, preferred_element_type=jnp.float32)
        v_t = lax.dot_general(wv, sn, nt_d, preferred_element_type=jnp.float32)
        bias = bias_ref[b]                                            # (S, 1) additive

        # --- multi-head attention. Each head output is (hd, HW); heads are
        #     concatenated on the sublane axis into (QKV, HW) and projected by
        #     a single K=QKV out-projection matmul after the loop. ---
        head_outs = []
        for h in range(heads):
            lo = h * head_dim
            qh_t = q_t[lo:lo + head_dim, :].astype(compute_dtype)     # (hd, HW)
            kh_t = k_t[lo:lo + head_dim, :].astype(compute_dtype)     # (hd, S)
            vh_t = v_t[lo:lo + head_dim, :].astype(compute_dtype)     # (hd, S)
            s_t = lax.dot_general(kh_t, qh_t, tn_d,
                                  preferred_element_type=jnp.float32) + bias  # (S, HW)
            m = jnp.max(s_t, axis=0, keepdims=True)
            p = jnp.exp(s_t - m)
            p = p / jnp.sum(p, axis=0, keepdims=True)                 # exact softmax
            head_outs.append(
                lax.dot_general(vh_t, p.astype(compute_dtype), nn_d,
                                preferred_element_type=jnp.float32))   # (hd, HW)
        ho_all = jnp.concatenate(head_outs, axis=0).astype(compute_dtype)  # (QKV, HW)
        o = lax.dot_general(wo, ho_all, nn_d,
                            preferred_element_type=jnp.float32)        # (C, HW)

        # --- gain + residual; lane-dense (C, HW) store ---
        out_ref[b] = x + g * o

    if block_b <= 2:
        for b in range(block_b):                 # small block: full unroll
            one_sample(b)
    else:
        def loop_body(b, carry):                 # bound live ranges for big blocks
            one_sample(b)
            return carry
        lax.fori_loop(0, block_b, loop_body, 0)


# ---------------------------------------------------------------------------
# VMEM-budget / device-aware block selection
# ---------------------------------------------------------------------------
def _pad_up(n, m):
    return ((n + m - 1) // m) * m


def _vmem_bytes_estimate(bb, C, HW, S, T, QKV, compute_bytes):
    """Rough VMEM footprint (lane/sublane padded, double-buffered pipeline bufs)."""
    f32 = 4
    c, hw = _pad_up(C, 8), _pad_up(HW, 128)
    s = _pad_up(S, 8)
    t = _pad_up(T, 128)
    qs, ql = _pad_up(QKV, 8), _pad_up(QKV, 128)
    total = 0
    total += 2 * 2 * bb * c * hw * f32                       # tgt in + out
    total += 2 * bb * s * t * f32                            # src
    total += 2 * bb * s * 128 * f32                          # mask bias (S, 1) padded
    total += 2 * c * hw * f32                                # pos emb (constant block)
    total += 2 * (qs * _pad_up(C, 128) + 2 * qs * t + c * ql) * compute_bytes  # weights
    total += 4 * c * 128 * f32 + 4 * 8 * t * f32             # norm params (tiny)
    # largest in-flight per-sample temporaries: q_t, k_t/v_t, scores, ho_all, o
    total += (qs * hw + 2 * qs * _pad_up(S, 128) + 2 * s * hw + qs * hw + c * hw) * f32
    return total


def _device_kind():
    try:
        return jax.devices()[0].device_kind.lower()
    except Exception:
        return ""


def _vmem_cap_bytes():
    kind = _device_kind()
    if "v7" in kind or "tpu7" in kind:
        return 56 * 1024 * 1024        # v7x: 64 MiB physical per TC -> keep headroom
    return 100 * 1024 * 1024           # v5e / v6e: 128 MiB physical


def _multi_tensorcore_chip():
    kind = _device_kind()
    return any(t in kind for t in ("v7", "tpu7", "v5p", "v4", "v3", "v2"))


def _pick_block_b(B, C, HW, S, T, QKV, compute_bytes, cap):
    divisors = [d for d in range(1, min(B, 8) + 1) if B % d == 0]
    fitting = [d for d in divisors
               if _vmem_bytes_estimate(d, C, HW, S, T, QKV, compute_bytes) <= cap] or [1]
    if _multi_tensorcore_chip():
        # Keep the grid length >= 2 so ("parallel",) can shard across TensorCores.
        split_ok = [d for d in fitting if B // d >= 2]
        return max(split_ok) if split_ok else max(fitting)
    return max(fitting)                 # single TC: maximize batch fusion per step


# ---------------------------------------------------------------------------
# Parameter prep (one-time) + forward wrapper
# ---------------------------------------------------------------------------
def prepare_cross_attention_params(params, pos_emb, *, compute_dtype=jnp.float32):
    """One-time prep hoisted off the per-call path: weights cast to the MXU
    compute dtype, pos_emb stored channel-major (1, C, HW), norm params shaped
    for direct in-kernel broadcast."""
    C = params["wq"].shape[1]
    T = params["wk"].shape[1]
    return {
        "pos_chw": jnp.transpose(pos_emb.astype(jnp.float32), (0, 2, 1)),  # (1, C, HW)
        "gn_w": params["gn_w"].reshape(C, 1).astype(jnp.float32),
        "gn_b": params["gn_b"].reshape(C, 1).astype(jnp.float32),
        "ln_w": params["ln_w"].reshape(1, T).astype(jnp.float32),
        "ln_b": params["ln_b"].reshape(1, T).astype(jnp.float32),
        "wq": params["wq"].astype(compute_dtype),
        "wk": params["wk"].astype(compute_dtype),
        "wv": params["wv"].astype(compute_dtype),
        "wo": params["wo"].astype(compute_dtype),
        "gain": params["gain"],
        "gain_scale": params["gain_scale"],
        "compute_dtype": compute_dtype,
    }


def cross_attention_forward(src, tgt, attn_mask, prepared, *, heads, block_b=None):
    """src: (B, S, T) f32; tgt: (B, C, H, W) f32 (NCHW); attn_mask: (B, S) bool
    (True = attend); prepared: prepare_cross_attention_params output.
    Returns (tgt + attn_out in NCHW, src), matching CrossAttention._forward."""
    B, C, H, W = tgt.shape
    HW = H * W
    S, T = src.shape[1], src.shape[2]
    QKV = prepared["wq"].shape[0]
    assert QKV % heads == 0
    head_dim = QKV // heads
    compute_dtype = prepared["compute_dtype"]
    cbytes = jnp.dtype(compute_dtype).itemsize

    cap = _vmem_cap_bytes()
    if block_b is None:
        block_b = _pick_block_b(B, C, HW, S, T, QKV, cbytes, cap)
    assert B % block_b == 0, "block_b must divide the batch size"
    est = _vmem_bytes_estimate(block_b, C, HW, S, T, QKV, cbytes)
    vmem_limit = int(min(cap, max(32 * 1024 * 1024, int(1.25 * est) + (4 << 20))))

    # Free reshape only: tgt stays channel-major all the way (no HBM transposes),
    # so the output's lane dim is HW (lane-dense for HW >= 128).
    tgt_chw = tgt.reshape(B, C, HW).astype(jnp.float32)
    # Additive mask bias (torch: (~mask) * -1e4), precomputed once per call.
    bias = jnp.where(attn_mask, 0.0, -10000.0).astype(jnp.float32)[:, :, None]  # (B,S,1)
    gain = jnp.exp(prepared["gain_scale"] * prepared["gain"]).reshape(1).astype(jnp.float32)

    kernel = functools.partial(_xattn_kernel, heads=heads, head_dim=head_dim,
                               block_b=block_b, compute_dtype=compute_dtype)

    out_chw = pl.pallas_call(
        kernel,
        out_shape=jax.ShapeDtypeStruct((B, C, HW), jnp.float32),
        grid_spec=pltpu.PrefetchScalarGridSpec(
            num_scalar_prefetch=0,
            grid=(B // block_b,),
            in_specs=[
                pl.BlockSpec((block_b, C, HW), lambda i: (i, 0, 0)),   # tgt (C-major)
                pl.BlockSpec((1, C, HW), lambda i: (0, 0, 0)),         # pos emb (shared)
                pl.BlockSpec((block_b, S, T), lambda i: (i, 0, 0)),    # src
                pl.BlockSpec((block_b, S, 1), lambda i: (i, 0, 0)),    # mask bias (f32)
                pl.BlockSpec((C, 1), lambda i: (0, 0)),                # GN weight
                pl.BlockSpec((C, 1), lambda i: (0, 0)),                # GN bias
                pl.BlockSpec((1, T), lambda i: (0, 0)),                # LN weight
                pl.BlockSpec((1, T), lambda i: (0, 0)),                # LN bias
                pl.BlockSpec((QKV, C), lambda i: (0, 0)),              # Wq (out, in)
                pl.BlockSpec((QKV, T), lambda i: (0, 0)),              # Wk
                pl.BlockSpec((QKV, T), lambda i: (0, 0)),              # Wv
                pl.BlockSpec((C, QKV), lambda i: (0, 0)),              # Wo
                pl.BlockSpec(memory_space=pltpu.MemorySpace.SMEM),     # effective gain
            ],
            out_specs=pl.BlockSpec((block_b, C, HW), lambda i: (i, 0, 0)),
        ),
        compiler_params=pltpu.CompilerParams(
            dimension_semantics=("parallel",),
            vmem_limit_bytes=vmem_limit),
    )(tgt_chw, prepared["pos_chw"], src.astype(jnp.float32), bias,
      prepared["gn_w"], prepared["gn_b"], prepared["ln_w"], prepared["ln_b"],
      prepared["wq"], prepared["wk"], prepared["wv"], prepared["wo"], gain)

    return out_chw.reshape(B, C, H, W), src


# ---------------------------------------------------------------------------
# Pure-JAX reference (mirrors the PyTorch module, f32)
# ---------------------------------------------------------------------------
def reference_forward(src, tgt, attn_mask, pos_emb, params, *, heads):
    B, C, H, W = tgt.shape
    HW = H * W
    S = src.shape[1]
    QKV = params["wq"].shape[0]
    hd = QKV // heads
    eps = 1e-5

    x = tgt.astype(jnp.float32)
    mean = x.mean(axis=(1, 2, 3), keepdims=True)
    var = ((x - mean) ** 2).mean(axis=(1, 2, 3), keepdims=True)
    xn = (x - mean) / jnp.sqrt(var + eps)
    xn = xn * params["gn_w"][0][None, :, None, None] + params["gn_b"][0][None, :, None, None]

    q_in = jnp.transpose(xn.reshape(B, C, HW), (0, 2, 1)) + pos_emb
    q = q_in @ params["wq"].T

    mu = src.mean(-1, keepdims=True)
    sv = ((src - mu) ** 2).mean(-1, keepdims=True)
    sn = (src - mu) / jnp.sqrt(sv + eps) * params["ln_w"][0] + params["ln_b"][0]
    k = sn @ params["wk"].T
    v = sn @ params["wv"].T

    qh = q.reshape(B, HW, heads, hd).transpose(0, 2, 1, 3)
    kh = k.reshape(B, S, heads, hd).transpose(0, 2, 1, 3)
    vh = v.reshape(B, S, heads, hd).transpose(0, 2, 1, 3)
    mask_bias = jnp.where(attn_mask, 0.0, -10000.0)[:, None, None, :]
    scores = jnp.einsum("bhqd,bhkd->bhqk", qh * (hd ** -0.5), kh) + mask_bias
    p = jax.nn.softmax(scores, axis=-1)
    oh = jnp.einsum("bhqk,bhkd->bhqd", p, vh)
    o = oh.transpose(0, 2, 1, 3).reshape(B, HW, QKV) @ params["wo"].T
    g = jnp.exp(params["gain_scale"] * params["gain"])
    out = tgt + jnp.transpose(o * g, (0, 2, 1)).reshape(B, C, H, W)
    return out, src


if __name__ == "__main__":
    # Small shapes consistent with the module (dim=32, emb_res=8, text_dim=128).
    B, C, H, W = 2, 32, 8, 8
    S, T = 16, 128
    heads = 4                      # head_dim = 32
    HW = H * W
    QKV = T                        # qkv_dim defaults to src_embed_dim (= text_dim)
    gain_scale = 200.0
    init_gain = 1.0

    key = jax.random.PRNGKey(0)
    ks = jax.random.split(key, 10)

    src = jax.random.normal(ks[0], (B, S, T), jnp.float32)
    tgt = jax.random.normal(ks[1], (B, C, H, W), jnp.float32)
    pos_emb = 0.02 * jax.random.normal(ks[2], (1, HW, C), jnp.float32)
    attn_mask = jnp.arange(S)[None, :] < jnp.array([S, S // 2])[:, None]   # (B, S) bool

    def xavier(k, out_f, in_f):
        bound = (6.0 / (in_f + out_f)) ** 0.5
        return jax.random.uniform(k, (out_f, in_f), jnp.float32, -bound, bound)

    # Torch Linear weights in their native (out, in) layout.
    params = {
        "wq": xavier(ks[3], QKV, C),     # q: Linear(dim -> qkv_dim)
        "wk": xavier(ks[4], QKV, T),     # k: Linear(text_dim -> qkv_dim)
        "wv": xavier(ks[5], QKV, T),     # v: Linear(text_dim -> qkv_dim)
        "wo": xavier(ks[6], C, QKV),     # out_proj: Linear(qkv_dim -> dim)
        "gn_w": 1.0 + 0.05 * jax.random.normal(ks[7], (1, C), jnp.float32),
        "gn_b": 0.05 * jax.random.normal(ks[8], (1, C), jnp.float32),
        "ln_w": 1.0 + 0.05 * jax.random.normal(ks[9], (1, T), jnp.float32),
        "ln_b": jnp.zeros((1, T), jnp.float32),
        "gain": jnp.asarray(jnp.log(init_gain) / gain_scale, jnp.float32),
        "gain_scale": jnp.asarray(gain_scale, jnp.float32),
    }

    ref_out, _ = reference_forward(src, tgt, attn_mask, pos_emb, params, heads=heads)

    # f32 MXU path (matches module semantics; exact softmax).
    # NOTE: compute_dtype=jnp.bfloat16 is supported for v6e/v7x weight-DMA /
    # MXU throughput; norms and softmax math stay f32 either way.
    prepared = prepare_cross_attention_params(params, pos_emb, compute_dtype=jnp.float32)
    tgt_out, src_out = cross_attention_forward(src, tgt, attn_mask, prepared, heads=heads)
    jax.block_until_ready(tgt_out)

    assert tgt_out.shape == tgt.shape and src_out.shape == src.shape
    err = float(jnp.max(jnp.abs(tgt_out - ref_out)))
    assert jnp.allclose(tgt_out, ref_out, rtol=1e-3, atol=1e-3), err

    print("KERNEL_OK")
</pallas_src>

<mosaic_0001>
module attributes {stable_mosaic.version = 11 : i64} {
  func.func @_xattn_kernel(%arg0: i32, %arg1: memref<2x32x64xf32, #tpu.memory_space<vmem>>, %arg2: memref<1x32x64xf32, #tpu.memory_space<vmem>>, %arg3: memref<2x16x128xf32, #tpu.memory_space<vmem>>, %arg4: memref<2x16x1xf32, #tpu.memory_space<vmem>>, %arg5: memref<32x1xf32, #tpu.memory_space<vmem>>, %arg6: memref<32x1xf32, #tpu.memory_space<vmem>>, %arg7: memref<1x128xf32, #tpu.memory_space<vmem>>, %arg8: memref<1x128xf32, #tpu.memory_space<vmem>>, %arg9: memref<128x32xf32, #tpu.memory_space<vmem>>, %arg10: memref<128x128xf32, #tpu.memory_space<vmem>>, %arg11: memref<128x128xf32, #tpu.memory_space<vmem>>, %arg12: memref<32x128xf32, #tpu.memory_space<vmem>>, %arg13: memref<1xf32, #tpu.memory_space<smem>>, %arg14: memref<2x32x64xf32, #tpu.memory_space<vmem>>) attributes {dimension_semantics = [#tpu.dimension_semantics<parallel>], iteration_bounds = array<i64: 1>, scalar_prefetch = 0 : i64, scratch_operands = 0 : i64, tpu.core_type = #tpu.core_type<tc>, window_params = [{transform_indices = @transform_0, window_bounds = array<i64: 2, 32, 64>}, {pipeline_mode = #tpu.pipeline_mode<synchronous>, transform_indices = @transform_1, window_bounds = array<i64: 1, 32, 64>}, {transform_indices = @transform_2, window_bounds = array<i64: 2, 16, 128>}, {transform_indices = @transform_3, window_bounds = array<i64: 2, 16, 1>}, {pipeline_mode = #tpu.pipeline_mode<synchronous>, transform_indices = @transform_4, window_bounds = array<i64: 32, 1>}, {pipeline_mode = #tpu.pipeline_mode<synchronous>, transform_indices = @transform_5, window_bounds = array<i64: 32, 1>}, {pipeline_mode = #tpu.pipeline_mode<synchronous>, transform_indices = @transform_6, window_bounds = array<i64: 1, 128>}, {pipeline_mode = #tpu.pipeline_mode<synchronous>, transform_indices = @transform_7, window_bounds = array<i64: 1, 128>}, {pipeline_mode = #tpu.pipeline_mode<synchronous>, transform_indices = @transform_8, window_bounds = array<i64: 128, 32>}, {pipeline_mode = #tpu.pipeline_mode<synchronous>, transform_indices = @transform_9, window_bounds = array<i64: 128, 128>}, {pipeline_mode = #tpu.pipeline_mode<synchronous>, transform_indices = @transform_10, window_bounds = array<i64: 128, 128>}, {pipeline_mode = #tpu.pipeline_mode<synchronous>, transform_indices = @transform_11, window_bounds = array<i64: 32, 128>}, {transform_indices = @transform_12, window_bounds = array<i64: 1>}, {transform_indices = @transform_13, window_bounds = array<i64: 2, 32, 64>}]} {
    %c0 = arith.constant 0 : index
    %0 = memref.load %arg13[%c0] : memref<1xf32, #tpu.memory_space<smem>>
    %c0_0 = arith.constant 0 : index
    %c0_1 = arith.constant 0 : index
    %c0_2 = arith.constant 0 : index
    %1 = vector.load %arg2[%c0_0, %c0_1, %c0_2] : memref<1x32x64xf32, #tpu.memory_space<vmem>>, vector<1x32x64xf32>
    %2 = vector.shape_cast %1 : vector<1x32x64xf32> to vector<32x64xf32>
    %c0_3 = arith.constant 0 : index
    %c0_4 = arith.constant 0 : index
    %3 = vector.load %arg5[%c0_3, %c0_4] : memref<32x1xf32, #tpu.memory_space<vmem>>, vector<32x1xf32>
    %c0_5 = arith.constant 0 : index
    %c0_6 = arith.constant 0 : index
    %4 = vector.load %arg6[%c0_5, %c0_6] : memref<32x1xf32, #tpu.memory_space<vmem>>, vector<32x1xf32>
    %c0_7 = arith.constant 0 : index
    %c0_8 = arith.constant 0 : index
    %5 = vector.load %arg7[%c0_7, %c0_8] : memref<1x128xf32, #tpu.memory_space<vmem>>, vector<1x128xf32>
    %c0_9 = arith.constant 0 : index
    %c0_10 = arith.constant 0 : index
    %6 = vector.load %arg8[%c0_9, %c0_10] : memref<1x128xf32, #tpu.memory_space<vmem>>, vector<1x128xf32>
    %c0_11 = arith.constant 0 : index
    %c0_12 = arith.constant 0 : index
    %7 = vector.load %arg9[%c0_11, %c0_12] : memref<128x32xf32, #tpu.memory_space<vmem>>, vector<128x32xf32>
    %c0_13 = arith.constant 0 : index
    %c0_14 = arith.constant 0 : index
    %8 = vector.load %arg10[%c0_13, %c0_14] : memref<128x128xf32, #tpu.memory_space<vmem>>, vector<128x128xf32>
    %c0_15 = arith.constant 0 : index
    %c0_16 = arith.constant 0 : index
    %9 = vector.load %arg11[%c0_15, %c0_16] : memref<128x128xf32, #tpu.memory_space<vmem>>, vector<128x128xf32>
    %c0_17 = arith.constant 0 : index
    %c0_18 = arith.constant 0 : index
    %10 = vector.load %arg12[%c0_17, %c0_18] : memref<32x128xf32, #tpu.memory_space<vmem>>, vector<32x128xf32>
    %c0_19 = arith.constant 0 : index
    %c0_20 = arith.constant 0 : index
    %c0_21 = arith.constant 0 : index
    %11 = vector.load %arg1[%c0_19, %c0_20, %c0_21] : memref<2x32x64xf32, #tpu.memory_space<vmem>>, vector<1x32x64xf32>
    %12 = vector.shape_cast %11 : vector<1x32x64xf32> to vector<32x64xf32>
    %13 = vector.shape_cast %12 : vector<32x64xf32> to vector<1x32x64xf32>
    %cst = arith.constant dense<0.000000e+00> : vector<1xf32>
    %14 = vector.multi_reduction <add>, %13, %cst [1, 2] : vector<1x32x64xf32> to vector<1xf32>
    %15 = vector.shape_cast %14 : vector<1xf32> to vector<1x1x1xf32>
    %16 = vector.extract %15[0, 0, 0] : f32 from vector<1x1x1xf32>
    %cst_22 = arith.constant 4.8828125E-4 : f32
    %17 = arith.mulf %16, %cst_22 : f32
    %18 = arith.mulf %12, %12 : vector<32x64xf32>
    %19 = vector.shape_cast %18 : vector<32x64xf32> to vector<1x32x64xf32>
    %cst_23 = arith.constant dense<0.000000e+00> : vector<1xf32>
    %20 = vector.multi_reduction <add>, %19, %cst_23 [1, 2] : vector<1x32x64xf32> to vector<1xf32>
    %21 = vector.shape_cast %20 : vector<1xf32> to vector<1x1x1xf32>
    %22 = vector.extract %21[0, 0, 0] : f32 from vector<1x1x1xf32>
    %cst_24 = arith.constant 4.8828125E-4 : f32
    %23 = arith.mulf %22, %cst_24 : f32
    %24 = arith.mulf %17, %17 : f32
    %25 = arith.subf %23, %24 : f32
    %26 = vector.broadcast %17 : f32 to vector<32x64xf32>
    %27 = arith.subf %12, %26 : vector<32x64xf32>
    %cst_25 = arith.constant 9.99999974E-6 : f32
    %28 = arith.addf %25, %cst_25 : f32
    %29 = math.rsqrt %28 : f32
    %30 = vector.broadcast %29 : f32 to vector<32x64xf32>
    %31 = arith.mulf %27, %30 : vector<32x64xf32>
    %32 = vector.broadcast %3 : vector<32x1xf32> to vector<32x64xf32>
    %33 = arith.mulf %31, %32 : vector<32x64xf32>
    %34 = vector.broadcast %4 : vector<32x1xf32> to vector<32x64xf32>
    %35 = arith.addf %33, %34 : vector<32x64xf32>
    %36 = arith.addf %35, %2 : vector<32x64xf32>
    %cst_26 = arith.constant 0.176776692 : f32
    %37 = vector.broadcast %cst_26 : f32 to vector<32x64xf32>
    %38 = arith.mulf %36, %37 : vector<32x64xf32>
    %cst_27 = arith.constant dense<0.000000e+00> : vector<128x64xf32>
    %39 = tpu.matmul %7, %38, %cst_27 {dimension_numbers = #tpu.dot_dimension_numbers<[1], [0], [0], [1], [0, 0, 1, 1], [], []>} : vector<128x32xf32>, vector<32x64xf32>, vector<128x64xf32> -> vector<128x64xf32>
    %c0_28 = arith.constant 0 : index
    %c0_29 = arith.constant 0 : index
    %c0_30 = arith.constant 0 : index
    %40 = vector.load %arg3[%c0_28, %c0_29, %c0_30] : memref<2x16x128xf32, #tpu.memory_space<vmem>>, vector<1x16x128xf32>
    %41 = vector.shape_cast %40 : vector<1x16x128xf32> to vector<16x128xf32>
    %cst_31 = arith.constant dense<0.000000e+00> : vector<16xf32>
    %42 = vector.multi_reduction <add>, %41, %cst_31 [1] : vector<16x128xf32> to vector<16xf32>
    %43 = vector.shape_cast %42 : vector<16xf32> to vector<16x1xf32>
    %cst_32 = arith.constant 7.812500e-03 : f32
    %44 = vector.broadcast %cst_32 : f32 to vector<16x1xf32>
    %45 = arith.mulf %43, %44 : vector<16x1xf32>
    %46 = arith.mulf %41, %41 : vector<16x128xf32>
    %cst_33 = arith.constant dense<0.000000e+00> : vector<16xf32>
    %47 = vector.multi_reduction <add>, %46, %cst_33 [1] : vector<16x128xf32> to vector<16xf32>
    %48 = vector.shape_cast %47 : vector<16xf32> to vector<16x1xf32>
    %cst_34 = arith.constant 7.812500e-03 : f32
    %49 = vector.broadcast %cst_34 : f32 to vector<16x1xf32>
    %50 = arith.mulf %48, %49 : vector<16x1xf32>
    %51 = arith.mulf %45, %45 : vector<16x1xf32>
    %52 = arith.subf %50, %51 : vector<16x1xf32>
    %53 = vector.broadcast %45 : vector<16x1xf32> to vector<16x128xf32>
    %54 = arith.subf %41, %53 : vector<16x128xf32>
    %cst_35 = arith.constant 9.99999974E-6 : f32
    %55 = vector.broadcast %cst_35 : f32 to vector<16x1xf32>
    %56 = arith.addf %52, %55 : vector<16x1xf32>
    %57 = math.rsqrt %56 : vector<16x1xf32>
    %58 = vector.broadcast %57 : vector<16x1xf32> to vector<16x128xf32>
    %59 = arith.mulf %54, %58 : vector<16x128xf32>
    %60 = vector.broadcast %5 : vector<1x128xf32> to vector<16x128xf32>
    %61 = arith.mulf %59, %60 : vector<16x128xf32>
    %62 = vector.broadcast %6 : vector<1x128xf32> to vector<16x128xf32>
    %63 = arith.addf %61, %62 : vector<16x128xf32>
    %cst_36 = arith.constant dense<0.000000e+00> : vector<128x16xf32>
    %64 = tpu.matmul %8, %63, %cst_36 {dimension_numbers = #tpu.dot_dimension_numbers<[1], [1], [0], [0], [0, 0, 1, 0], [], []>} : vector<128x128xf32>, vector<16x128xf32>, vector<128x16xf32> -> vector<128x16xf32>
    %cst_37 = arith.constant dense<0.000000e+00> : vector<128x16xf32>
    %65 = tpu.matmul %9, %63, %cst_37 {dimension_numbers = #tpu.dot_dimension_numbers<[1], [1], [0], [0], [0, 0, 1, 0], [], []>} : vector<128x128xf32>, vector<16x128xf32>, vector<128x16xf32> -> vector<128x16xf32>
    %c0_38 = arith.constant 0 : index
    %c0_39 = arith.constant 0 : index
    %c0_40 = arith.constant 0 : index
    %66 = vector.load %arg4[%c0_38, %c0_39, %c0_40] : memref<2x16x1xf32, #tpu.memory_space<vmem>>, vector<1x16x1xf32>
    %67 = vector.shape_cast %66 : vector<1x16x1xf32> to vector<16x1xf32>
    %68 = vector.extract_strided_slice %39 {offsets = [0, 0], sizes = [32, 64], strides = [1, 1]} : vector<128x64xf32> to vector<32x64xf32>
    %69 = vector.extract_strided_slice %64 {offsets = [0, 0], sizes = [32, 16], strides = [1, 1]} : vector<128x16xf32> to vector<32x16xf32>
    %70 = vector.extract_strided_slice %65 {offsets = [0, 0], sizes = [32, 16], strides = [1, 1]} : vector<128x16xf32> to vector<32x16xf32>
    %cst_41 = arith.constant dense<0.000000e+00> : vector<16x64xf32>
    %71 = tpu.matmul %69, %68, %cst_41 {dimension_numbers = #tpu.dot_dimension_numbers<[0], [0], [1], [1], [0, 1, 1, 1], [], []>} : vector<32x16xf32>, vector<32x64xf32>, vector<16x64xf32> -> vector<16x64xf32>
    %72 = vector.broadcast %67 : vector<16x1xf32> to vector<16x64xf32>
    %73 = arith.addf %71, %72 : vector<16x64xf32>
    %cst_42 = arith.constant dense<0xFF800000> : vector<64xf32>
    %74 = vector.multi_reduction <maximumf>, %73, %cst_42 [0] : vector<16x64xf32> to vector<64xf32>
    %75 = vector.shape_cast %74 : vector<64xf32> to vector<1x64xf32>
    %76 = vector.broadcast %75 : vector<1x64xf32> to vector<16x64xf32>
    %77 = arith.subf %73, %76 : vector<16x64xf32>
    %78 = math.exp %77 : vector<16x64xf32>
    %cst_43 = arith.constant dense<0.000000e+00> : vector<64xf32>
    %79 = vector.multi_reduction <add>, %78, %cst_43 [0] : vector<16x64xf32> to vector<64xf32>
    %80 = vector.shape_cast %79 : vector<64xf32> to vector<1x64xf32>
    %81 = vector.broadcast %80 : vector<1x64xf32> to vector<16x64xf32>
    %82 = arith.divf %78, %81 : vector<16x64xf32>
    %cst_44 = arith.constant dense<0.000000e+00> : vector<32x64xf32>
    %83 = tpu.matmul %70, %82, %cst_44 {dimension_numbers = #tpu.dot_dimension_numbers<[1], [0], [0], [1], [0, 0, 1, 1], [], []>} : vector<32x16xf32>, vector<16x64xf32>, vector<32x64xf32> -> vector<32x64xf32>
    %84 = vector.extract_strided_slice %39 {offsets = [32, 0], sizes = [32, 64], strides = [1, 1]} : vector<128x64xf32> to vector<32x64xf32>
    %85 = vector.extract_strided_slice %64 {offsets = [32, 0], sizes = [32, 16], strides = [1, 1]} : vector<128x16xf32> to vector<32x16xf32>
    %86 = vector.extract_strided_slice %65 {offsets = [32, 0], sizes = [32, 16], strides = [1, 1]} : vector<128x16xf32> to vector<32x16xf32>
    %cst_45 = arith.constant dense<0.000000e+00> : vector<16x64xf32>
    %87 = tpu.matmul %85, %84, %cst_45 {dimension_numbers = #tpu.dot_dimension_numbers<[0], [0], [1], [1], [0, 1, 1, 1], [], []>} : vector<32x16xf32>, vector<32x64xf32>, vector<16x64xf32> -> vector<16x64xf32>
    %88 = vector.broadcast %67 : vector<16x1xf32> to vector<16x64xf32>
    %89 = arith.addf %87, %88 : vector<16x64xf32>
    %cst_46 = arith.constant dense<0xFF800000> : vector<64xf32>
    %90 = vector.multi_reduction <maximumf>, %89, %cst_46 [0] : vector<16x64xf32> to vector<64xf32>
    %91 = vector.shape_cast %90 : vector<64xf32> to vector<1x64xf32>
    %92 = vector.broadcast %91 : vector<1x64xf32> to vector<16x64xf32>
    %93 = arith.subf %89, %92 : vector<16x64xf32>
    %94 = math.exp %93 : vector<16x64xf32>
    %cst_47 = arith.constant dense<0.000000e+00> : vector<64xf32>
    %95 = vector.multi_reduction <add>, %94, %cst_47 [0] : vector<16x64xf32> to vector<64xf32>
    %96 = vector.shape_cast %95 : vector<64xf32> to vector<1x64xf32>
    %97 = vector.broadcast %96 : vector<1x64xf32> to vector<16x64xf32>
    %98 = arith.divf %94, %97 : vector<16x64xf32>
    %cst_48 = arith.constant dense<0.000000e+00> : vector<32x64xf32>
    %99 = tpu.matmul %86, %98, %cst_48 {dimension_numbers = #tpu.dot_dimension_numbers<[1], [0], [0], [1], [0, 0, 1, 1], [], []>} : vector<32x16xf32>, vector<16x64xf32>, vector<32x64xf32> -> vector<32x64xf32>
    %100 = vector.extract_strided_slice %39 {offsets = [64, 0], sizes = [32, 64], strides = [1, 1]} : vector<128x64xf32> to vector<32x64xf32>
    %101 = vector.extract_strided_slice %64 {offsets = [64, 0], sizes = [32, 16], strides = [1, 1]} : vector<128x16xf32> to vector<32x16xf32>
    %102 = vector.extract_strided_slice %65 {offsets = [64, 0], sizes = [32, 16], strides = [1, 1]} : vector<128x16xf32> to vector<32x16xf32>
    %cst_49 = arith.constant dense<0.000000e+00> : vector<16x64xf32>
    %103 = tpu.matmul %101, %100, %cst_49 {dimension_numbers = #tpu.dot_dimension_numbers<[0], [0], [1], [1], [0, 1, 1, 1], [], []>} : vector<32x16xf32>, vector<32x64xf32>, vector<16x64xf32> -> vector<16x64xf32>
    %104 = vector.broadcast %67 : vector<16x1xf32> to vector<16x64xf32>
    %105 = arith.addf %103, %104 : vector<16x64xf32>
    %cst_50 = arith.constant dense<0xFF800000> : vector<64xf32>
    %106 = vector.multi_reduction <maximumf>, %105, %cst_50 [0] : vector<16x64xf32> to vector<64xf32>
    %107 = vector.shape_cast %106 : vector<64xf32> to vector<1x64xf32>
    %108 = vector.broadcast %107 : vector<1x64xf32> to vector<16x64xf32>
    %109 = arith.subf %105, %108 : vector<16x64xf32>
    %110 = math.exp %109 : vector<16x64xf32>
    %cst_51 = arith.constant dense<0.000000e+00> : vector<64xf32>
    %111 = vector.multi_reduction <add>, %110, %cst_51 [0] : vector<16x64xf32> to vector<64xf32>
    %112 = vector.shape_cast %111 : vector<64xf32> to vector<1x64xf32>
    %113 = vector.broadcast %112 : vector<1x64xf32> to vector<16x64xf32>
    %114 = arith.divf %110, %113 : vector<16x64xf32>
    %cst_52 = arith.constant dense<0.000000e+00> : vector<32x64xf32>
    %115 = tpu.matmul %102, %114, %cst_52 {dimension_numbers = #tpu.dot_dimension_numbers<[1], [0], [0], [1], [0, 0, 1, 1], [], []>} : vector<32x16xf32>, vector<16x64xf32>, vector<32x64xf32> -> vector<32x64xf32>
    %116 = vector.extract_strided_slice %39 {offsets = [96, 0], sizes = [32, 64], strides = [1, 1]} : vector<128x64xf32> to vector<32x64xf32>
    %117 = vector.extract_strided_slice %64 {offsets = [96, 0], sizes = [32, 16], strides = [1, 1]} : vector<128x16xf32> to vector<32x16xf32>
    %118 = vector.extract_strided_slice %65 {offsets = [96, 0], sizes = [32, 16], strides = [1, 1]} : vector<128x16xf32> to vector<32x16xf32>
    %cst_53 = arith.constant dense<0.000000e+00> : vector<16x64xf32>
    %119 = tpu.matmul %117, %116, %cst_53 {dimension_numbers = #tpu.dot_dimension_numbers<[0], [0], [1], [1], [0, 1, 1, 1], [], []>} : vector<32x16xf32>, vector<32x64xf32>, vector<16x64xf32> -> vector<16x64xf32>
    %120 = vector.broadcast %67 : vector<16x1xf32> to vector<16x64xf32>
    %121 = arith.addf %119, %120 : vector<16x64xf32>
    %cst_54 = arith.constant dense<0xFF800000> : vector<64xf32>
    %122 = vector.multi_reduction <maximumf>, %121, %cst_54 [0] : vector<16x64xf32> to vector<64xf32>
    %123 = vector.shape_cast %122 : vector<64xf32> to vector<1x64xf32>
    %124 = vector.broadcast %123 : vector<1x64xf32> to vector<16x64xf32>
    %125 = arith.subf %121, %124 : vector<16x64xf32>
    %126 = math.exp %125 : vector<16x64xf32>
    %cst_55 = arith.constant dense<0.000000e+00> : vector<64xf32>
    %127 = vector.multi_reduction <add>, %126, %cst_55 [0] : vector<16x64xf32> to vector<64xf32>
    %128 = vector.shape_cast %127 : vector<64xf32> to vector<1x64xf32>
    %129 = vector.broadcast %128 : vector<1x64xf32> to vector<16x64xf32>
    %130 = arith.divf %126, %129 : vector<16x64xf32>
    %cst_56 = arith.constant dense<0.000000e+00> : vector<32x64xf32>
    %131 = tpu.matmul %118, %130, %cst_56 {dimension_numbers = #tpu.dot_dimension_numbers<[1], [0], [0], [1], [0, 0, 1, 1], [], []>} : vector<32x16xf32>, vector<16x64xf32>, vector<32x64xf32> -> vector<32x64xf32>
    %132 = tpu.concatenate %83, %99, %115, %131 in 0 : vector<32x64xf32>, vector<32x64xf32>, vector<32x64xf32>, vector<32x64xf32> -> vector<128x64xf32>
    %cst_57 = arith.constant dense<0.000000e+00> : vector<32x64xf32>
    %133 = tpu.matmul %10, %132, %cst_57 {dimension_numbers = #tpu.dot_dimension_numbers<[1], [0], [0], [1], [0, 0, 1, 1], [], []>} : vector<32x128xf32>, vector<128x64xf32>, vector<32x64xf32> -> vector<32x64xf32>
    %134 = vector.broadcast %0 : f32 to vector<32x64xf32>
    %135 = arith.mulf %134, %133 : vector<32x64xf32>
    %136 = arith.addf %12, %135 : vector<32x64xf32>
    %c0_58 = arith.constant 0 : index
    %c0_59 = arith.constant 0 : index
    %c0_60 = arith.constant 0 : index
    %137 = vector.load %arg14[%c0_58, %c0_59, %c0_60] : memref<2x32x64xf32, #tpu.memory_space<vmem>>, vector<1x32x64xf32>
    %138 = vector.shape_cast %137 : vector<1x32x64xf32> to vector<32x64xf32>
    %139 = vector.shape_cast %136 : vector<32x64xf32> to vector<1x32x64xf32>
    tpu.vector_store %arg14[%c0_58, %c0_59, %c0_60], %139 {strides = array<i32>} : memref<2x32x64xf32, #tpu.memory_space<vmem>>, vector<1x32x64xf32>,
    %c1 = arith.constant 1 : index
    %c0_61 = arith.constant 0 : index
    %c0_62 = arith.constant 0 : index
    %140 = vector.load %arg1[%c1, %c0_61, %c0_62] : memref<2x32x64xf32, #tpu.memory_space<vmem>>, vector<1x32x64xf32>
    %141 = vector.shape_cast %140 : vector<1x32x64xf32> to vector<32x64xf32>
    %142 = vector.shape_cast %141 : vector<32x64xf32> to vector<1x32x64xf32>
    %cst_63 = arith.constant dense<0.000000e+00> : vector<1xf32>
    %143 = vector.multi_reduction <add>, %142, %cst_63 [1, 2] : vector<1x32x64xf32> to vector<1xf32>
    %144 = vector.shape_cast %143 : vector<1xf32> to vector<1x1x1xf32>
    %145 = vector.extract %144[0, 0, 0] : f32 from vector<1x1x1xf32>
    %cst_64 = arith.constant 4.8828125E-4 : f32
    %146 = arith.mulf %145, %cst_64 : f32
    %147 = arith.mulf %141, %141 : vector<32x64xf32>
    %148 = vector.shape_cast %147 : vector<32x64xf32> to vector<1x32x64xf32>
    %cst_65 = arith.constant dense<0.000000e+00> : vector<1xf32>
    %149 = vector.multi_reduction <add>, %148, %cst_65 [1, 2] : vector<1x32x64xf32> to vector<1xf32>
    %150 = vector.shape_cast %149 : vector<1xf32> to vector<1x1x1xf32>
    %151 = vector.extract %150[0, 0, 0] : f32 from vector<1x1x1xf32>
    %cst_66 = arith.constant 4.8828125E-4 : f32
    %152 = arith.mulf %151, %cst_66 : f32
    %153 = arith.mulf %146, %146 : f32
    %154 = arith.subf %152, %153 : f32
    %155 = vector.broadcast %146 : f32 to vector<32x64xf32>
    %156 = arith.subf %141, %155 : vector<32x64xf32>
    %cst_67 = arith.constant 9.99999974E-6 : f32
    %157 = arith.addf %154, %cst_67 : f32
    %158 = math.rsqrt %157 : f32
    %159 = vector.broadcast %158 : f32 to vector<32x64xf32>
    %160 = arith.mulf %156, %159 : vector<32x64xf32>
    %161 = vector.broadcast %3 : vector<32x1xf32> to vector<32x64xf32>
    %162 = arith.mulf %160, %161 : vector<32x64xf32>
    %163 = vector.broadcast %4 : vector<32x1xf32> to vector<32x64xf32>
    %164 = arith.addf %162, %163 : vector<32x64xf32>
    %165 = arith.addf %164, %2 : vector<32x64xf32>
    %cst_68 = arith.constant 0.176776692 : f32
    %166 = vector.broadcast %cst_68 : f32 to vector<32x64xf32>
    %167 = arith.mulf %165, %166 : vector<32x64xf32>
    %cst_69 = arith.constant dense<0.000000e+00> : vector<128x64xf32>
    %168 = tpu.matmul %7, %167, %cst_69 {dimension_numbers = #tpu.dot_dimension_numbers<[1], [0], [0], [1], [0, 0, 1, 1], [], []>} : vector<128x32xf32>, vector<32x64xf32>, vector<128x64xf32> -> vector<128x64xf32>
    %c1_70 = arith.constant 1 : index
    %c0_71 = arith.constant 0 : index
    %c0_72 = arith.constant 0 : index
    %169 = vector.load %arg3[%c1_70, %c0_71, %c0_72] : memref<2x16x128xf32, #tpu.memory_space<vmem>>, vector<1x16x128xf32>
    %170 = vector.shape_cast %169 : vector<1x16x128xf32> to vector<16x128xf32>
    %cst_73 = arith.constant dense<0.000000e+00> : vector<16xf32>
    %171 = vector.multi_reduction <add>, %170, %cst_73 [1] : vector<16x128xf32> to vector<16xf32>
    %172 = vector.shape_cast %171 : vector<16xf32> to vector<16x1xf32>
    %cst_74 = arith.constant 7.812500e-03 : f32
    %173 = vector.broadcast %cst_74 : f32 to vector<16x1xf32>
    %174 = arith.mulf %172, %173 : vector<16x1xf32>
    %175 = arith.mulf %170, %170 : vector<16x128xf32>
    %cst_75 = arith.constant dense<0.000000e+00> : vector<16xf32>
    %176 = vector.multi_reduction <add>, %175, %cst_75 [1] : vector<16x128xf32> to vector<16xf32>
    %177 = vector.shape_cast %176 : vector<16xf32> to vector<16x1xf32>
    %cst_76 = arith.constant 7.812500e-03 : f32
    %178 = vector.broadcast %cst_76 : f32 to vector<16x1xf32>
    %179 = arith.mulf %177, %178 : vector<16x1xf32>
    %180 = arith.mulf %174, %174 : vector<16x1xf32>
    %181 = arith.subf %179, %180 : vector<16x1xf32>
    %182 = vector.broadcast %174 : vector<16x1xf32> to vector<16x128xf32>
    %183 = arith.subf %170, %182 : vector<16x128xf32>
    %cst_77 = arith.constant 9.99999974E-6 : f32
    %184 = vector.broadcast %cst_77 : f32 to vector<16x1xf32>
    %185 = arith.addf %181, %184 : vector<16x1xf32>
    %186 = math.rsqrt %185 : vector<16x1xf32>
    %187 = vector.broadcast %186 : vector<16x1xf32> to vector<16x128xf32>
    %188 = arith.mulf %183, %187 : vector<16x128xf32>
    %189 = vector.broadcast %5 : vector<1x128xf32> to vector<16x128xf32>
    %190 = arith.mulf %188, %189 : vector<16x128xf32>
    %191 = vector.broadcast %6 : vector<1x128xf32> to vector<16x128xf32>
    %192 = arith.addf %190, %191 : vector<16x128xf32>
    %cst_78 = arith.constant dense<0.000000e+00> : vector<128x16xf32>
    %193 = tpu.matmul %8, %192, %cst_78 {dimension_numbers = #tpu.dot_dimension_numbers<[1], [1], [0], [0], [0, 0, 1, 0], [], []>} : vector<128x128xf32>, vector<16x128xf32>, vector<128x16xf32> -> vector<128x16xf32>
    %cst_79 = arith.constant dense<0.000000e+00> : vector<128x16xf32>
    %194 = tpu.matmul %9, %192, %cst_79 {dimension_numbers = #tpu.dot_dimension_numbers<[1], [1], [0], [0], [0, 0, 1, 0], [], []>} : vector<128x128xf32>, vector<16x128xf32>, vector<128x16xf32> -> vector<128x16xf32>
    %c1_80 = arith.constant 1 : index
    %c0_81 = arith.constant 0 : index
    %c0_82 = arith.constant 0 : index
    %195 = vector.load %arg4[%c1_80, %c0_81, %c0_82] : memref<2x16x1xf32, #tpu.memory_space<vmem>>, vector<1x16x1xf32>
    %196 = vector.shape_cast %195 : vector<1x16x1xf32> to vector<16x1xf32>
    %197 = vector.extract_strided_slice %168 {offsets = [0, 0], sizes = [32, 64], strides = [1, 1]} : vector<128x64xf32> to vector<32x64xf32>
    %198 = vector.extract_strided_slice %193 {offsets = [0, 0], sizes = [32, 16], strides = [1, 1]} : vector<128x16xf32> to vector<32x16xf32>
    %199 = vector.extract_strided_slice %194 {offsets = [0, 0], sizes = [32, 16], strides = [1, 1]} : vector<128x16xf32> to vector<32x16xf32>
    %cst_83 = arith.constant dense<0.000000e+00> : vector<16x64xf32>
    %200 = tpu.matmul %198, %197, %cst_83 {dimension_numbers = #tpu.dot_dimension_numbers<[0], [0], [1], [1], [0, 1, 1, 1], [], []>} : vector<32x16xf32>, vector<32x64xf32>, vector<16x64xf32> -> vector<16x64xf32>
    %201 = vector.broadcast %196 : vector<16x1xf32> to vector<16x64xf32>
    %202 = arith.addf %200, %201 : vector<16x64xf32>
    %cst_84 = arith.constant dense<0xFF800000> : vector<64xf32>
    %203 = vector.multi_reduction <maximumf>, %202, %cst_84 [0] : vector<16x64xf32> to vector<64xf32>
    %204 = vector.shape_cast %203 : vector<64xf32> to vector<1x64xf32>
    %205 = vector.broadcast %204 : vector<1x64xf32> to vector<16x64xf32>
    %206 = arith.subf %202, %205 : vector<16x64xf32>
    %207 = math.exp %206 : vector<16x64xf32>
    %cst_85 = arith.constant dense<0.000000e+00> : vector<64xf32>
    %208 = vector.multi_reduction <add>, %207, %cst_85 [0] : vector<16x64xf32> to vector<64xf32>
    %209 = vector.shape_cast %208 : vector<64xf32> to vector<1x64xf32>
    %210 = vector.broadcast %209 : vector<1x64xf32> to vector<16x64xf32>
    %211 = arith.divf %207, %210 : vector<16x64xf32>
    %cst_86 = arith.constant dense<0.000000e+00> : vector<32x64xf32>
    %212 = tpu.matmul %199, %211, %cst_86 {dimension_numbers = #tpu.dot_dimension_numbers<[1], [0], [0], [1], [0, 0, 1, 1], [], []>} : vector<32x16xf32>, vector<16x64xf32>, vector<32x64xf32> -> vector<32x64xf32>
    %213 = vector.extract_strided_slice %168 {offsets = [32, 0], sizes = [32, 64], strides = [1, 1]} : vector<128x64xf32> to vector<32x64xf32>
    %214 = vector.extract_strided_slice %193 {offsets = [32, 0], sizes = [32, 16], strides = [1, 1]} : vector<128x16xf32> to vector<32x16xf32>
    %215 = vector.extract_strided_slice %194 {offsets = [32, 0], sizes = [32, 16], strides = [1, 1]} : vector<128x16xf32> to vector<32x16xf32>
    %cst_87 = arith.constant dense<0.000000e+00> : vector<16x64xf32>
    %216 = tpu.matmul %214, %213, %cst_87 {dimension_numbers = #tpu.dot_dimension_numbers<[0], [0], [1], [1], [0, 1, 1, 1], [], []>} : vector<32x16xf32>, vector<32x64xf32>, vector<16x64xf32> -> vector<16x64xf32>
    %217 = vector.broadcast %196 : vector<16x1xf32> to vector<16x64xf32>
    %218 = arith.addf %216, %217 : vector<16x64xf32>
    %cst_88 = arith.constant dense<0xFF800000> : vector<64xf32>
    %219 = vector.multi_reduction <maximumf>, %218, %cst_88 [0] : vector<16x64xf32> to vector<64xf32>
    %220 = vector.shape_cast %219 : vector<64xf32> to vector<1x64xf32>
    %221 = vector.broadcast %220 : vector<1x64xf32> to vector<16x64xf32>
    %222 = arith.subf %218, %221 : vector<16x64xf32>
    %223 = math.exp %222 : vector<16x64xf32>
    %cst_89 = arith.constant dense<0.000000e+00> : vector<64xf32>
    %224 = vector.multi_reduction <add>, %223, %cst_89 [0] : vector<16x64xf32> to vector<64xf32>
    %225 = vector.shape_cast %224 : vector<64xf32> to vector<1x64xf32>
    %226 = vector.broadcast %225 : vector<1x64xf32> to vector<16x64xf32>
    %227 = arith.divf %223, %226 : vector<16x64xf32>
    %cst_90 = arith.constant dense<0.000000e+00> : vector<32x64xf32>
    %228 = tpu.matmul %215, %227, %cst_90 {dimension_numbers = #tpu.dot_dimension_numbers<[1], [0], [0], [1], [0, 0, 1, 1], [], []>} : vector<32x16xf32>, vector<16x64xf32>, vector<32x64xf32> -> vector<32x64xf32>
    %229 = vector.extract_strided_slice %168 {offsets = [64, 0], sizes = [32, 64], strides = [1, 1]} : vector<128x64xf32> to vector<32x64xf32>
    %230 = vector.extract_strided_slice %193 {offsets = [64, 0], sizes = [32, 16], strides = [1, 1]} : vector<128x16xf32> to vector<32x16xf32>
    %231 = vector.extract_strided_slice %194 {offsets = [64, 0], sizes = [32, 16], strides = [1, 1]} : vector<128x16xf32> to vector<32x16xf32>
    %cst_91 = arith.constant dense<0.000000e+00> : vector<16x64xf32>
    %232 = tpu.matmul %230, %229, %cst_91 {dimension_numbers = #tpu.dot_dimension_numbers<[0], [0], [1], [1], [0, 1, 1, 1], [], []>} : vector<32x16xf32>, vector<32x64xf32>, vector<16x64xf32> -> vector<16x64xf32>
    %233 = vector.broadcast %196 : vector<16x1xf32> to vector<16x64xf32>
    %234 = arith.addf %232, %233 : vector<16x64xf32>
    %cst_92 = arith.constant dense<0xFF800000> : vector<64xf32>
    %235 = vector.multi_reduction <maximumf>, %234, %cst_92 [0] : vector<16x64xf32> to vector<64xf32>
    %236 = vector.shape_cast %235 : vector<64xf32> to vector<1x64xf32>
    %237 = vector.broadcast %236 : vector<1x64xf32> to vector<16x64xf32>
    %238 = arith.subf %234, %237 : vector<16x64xf32>
    %239 = math.exp %238 : vector<16x64xf32>
    %cst_93 = arith.constant dense<0.000000e+00> : vector<64xf32>
    %240 = vector.multi_reduction <add>, %239, %cst_93 [0] : vector<16x64xf32> to vector<64xf32>
    %241 = vector.shape_cast %240 : vector<64xf32> to vector<1x64xf32>
    %242 = vector.broadcast %241 : vector<1x64xf32> to vector<16x64xf32>
    %243 = arith.divf %239, %242 : vector<16x64xf32>
    %cst_94 = arith.constant dense<0.000000e+00> : vector<32x64xf32>
    %244 = tpu.matmul %231, %243, %cst_94 {dimension_numbers = #tpu.dot_dimension_numbers<[1], [0], [0], [1], [0, 0, 1, 1], [], []>} : vector<32x16xf32>, vector<16x64xf32>, vector<32x64xf32> -> vector<32x64xf32>
    %245 = vector.extract_strided_slice %168 {offsets = [96, 0], sizes = [32, 64], strides = [1, 1]} : vector<128x64xf32> to vector<32x64xf32>
    %246 = vector.extract_strided_slice %193 {offsets = [96, 0], sizes = [32, 16], strides = [1, 1]} : vector<128x16xf32> to vector<32x16xf32>
    %247 = vector.extract_strided_slice %194 {offsets = [96, 0], sizes = [32, 16], strides = [1, 1]} : vector<128x16xf32> to vector<32x16xf32>
    %cst_95 = arith.constant dense<0.000000e+00> : vector<16x64xf32>
    %248 = tpu.matmul %246, %245, %cst_95 {dimension_numbers = #tpu.dot_dimension_numbers<[0], [0], [1], [1], [0, 1, 1, 1], [], []>} : vector<32x16xf32>, vector<32x64xf32>, vector<16x64xf32> -> vector<16x64xf32>
    %249 = vector.broadcast %196 : vector<16x1xf32> to vector<16x64xf32>
    %250 = arith.addf %248, %249 : vector<16x64xf32>
    %cst_96 = arith.constant dense<0xFF800000> : vector<64xf32>
    %251 = vector.multi_reduction <maximumf>, %250, %cst_96 [0] : vector<16x64xf32> to vector<64xf32>
    %252 = vector.shape_cast %251 : vector<64xf32> to vector<1x64xf32>
    %253 = vector.broadcast %252 : vector<1x64xf32> to vector<16x64xf32>
    %254 = arith.subf %250, %253 : vector<16x64xf32>
    %255 = math.exp %254 : vector<16x64xf32>
    %cst_97 = arith.constant dense<0.000000e+00> : vector<64xf32>
    %256 = vector.multi_reduction <add>, %255, %cst_97 [0] : vector<16x64xf32> to vector<64xf32>
    %257 = vector.shape_cast %256 : vector<64xf32> to vector<1x64xf32>
    %258 = vector.broadcast %257 : vector<1x64xf32> to vector<16x64xf32>
    %259 = arith.divf %255, %258 : vector<16x64xf32>
    %cst_98 = arith.constant dense<0.000000e+00> : vector<32x64xf32>
    %260 = tpu.matmul %247, %259, %cst_98 {dimension_numbers = #tpu.dot_dimension_numbers<[1], [0], [0], [1], [0, 0, 1, 1], [], []>} : vector<32x16xf32>, vector<16x64xf32>, vector<32x64xf32> -> vector<32x64xf32>
    %261 = tpu.concatenate %212, %228, %244, %260 in 0 : vector<32x64xf32>, vector<32x64xf32>, vector<32x64xf32>, vector<32x64xf32> -> vector<128x64xf32>
    %cst_99 = arith.constant dense<0.000000e+00> : vector<32x64xf32>
    %262 = tpu.matmul %10, %261, %cst_99 {dimension_numbers = #tpu.dot_dimension_numbers<[1], [0], [0], [1], [0, 0, 1, 1], [], []>} : vector<32x128xf32>, vector<128x64xf32>, vector<32x64xf32> -> vector<32x64xf32>
    %263 = vector.broadcast %0 : f32 to vector<32x64xf32>
    %264 = arith.mulf %263, %262 : vector<32x64xf32>
    %265 = arith.addf %141, %264 : vector<32x64xf32>
    %c1_100 = arith.constant 1 : index
    %c0_101 = arith.constant 0 : index
    %c0_102 = arith.constant 0 : index
    %266 = vector.load %arg14[%c1_100, %c0_101, %c0_102] : memref<2x32x64xf32, #tpu.memory_space<vmem>>, vector<1x32x64xf32>
    %267 = vector.shape_cast %266 : vector<1x32x64xf32> to vector<32x64xf32>
    %268 = vector.shape_cast %265 : vector<32x64xf32> to vector<1x32x64xf32>
    tpu.vector_store %arg14[%c1_100, %c0_101, %c0_102], %268 {strides = array<i32>} : memref<2x32x64xf32, #tpu.memory_space<vmem>>, vector<1x32x64xf32>,
    return
  }
  func.func @transform_0(%arg0: i32) -> (i32, i32, i32) {
    %c0_i32 = arith.constant 0 : i32
    %c0_i32_0 = arith.constant 0 : i32
    %c0_i32_1 = arith.constant 0 : i32
    return %arg0, %c0_i32, %c0_i32_0 : i32, i32, i32
  }
  func.func @transform_1(%arg0: i32) -> (i32, i32, i32) {
    %c0_i32 = arith.constant 0 : i32
    %c0_i32_0 = arith.constant 0 : i32
    %c0_i32_1 = arith.constant 0 : i32
    %c0_i32_2 = arith.constant 0 : i32
    return %c0_i32, %c0_i32_0, %c0_i32_1 : i32, i32, i32
  }
  func.func @transform_2(%arg0: i32) -> (i32, i32, i32) {
    %c0_i32 = arith.constant 0 : i32
    %c0_i32_0 = arith.constant 0 : i32
    %c0_i32_1 = arith.constant 0 : i32
    return %arg0, %c0_i32, %c0_i32_0 : i32, i32, i32
  }
  func.func @transform_3(%arg0: i32) -> (i32, i32, i32) {
    %c0_i32 = arith.constant 0 : i32
    %c0_i32_0 = arith.constant 0 : i32
    %c0_i32_1 = arith.constant 0 : i32
    return %arg0, %c0_i32, %c0_i32_0 : i32, i32, i32
  }
  func.func @transform_4(%arg0: i32) -> (i32, i32) {
    %c0_i32 = arith.constant 0 : i32
    %c0_i32_0 = arith.constant 0 : i32
    %c0_i32_1 = arith.constant 0 : i32
    return %c0_i32, %c0_i32_0 : i32, i32
  }
  func.func @transform_5(%arg0: i32) -> (i32, i32) {
    %c0_i32 = arith.constant 0 : i32
    %c0_i32_0 = arith.constant 0 : i32
    %c0_i32_1 = arith.constant 0 : i32
    return %c0_i32, %c0_i32_0 : i32, i32
  }
  func.func @transform_6(%arg0: i32) -> (i32, i32) {
    %c0_i32 = arith.constant 0 : i32
    %c0_i32_0 = arith.constant 0 : i32
    %c0_i32_1 = arith.constant 0 : i32
    return %c0_i32, %c0_i32_0 : i32, i32
  }
  func.func @transform_7(%arg0: i32) -> (i32, i32) {
    %c0_i32 = arith.constant 0 : i32
    %c0_i32_0 = arith.constant 0 : i32
    %c0_i32_1 = arith.constant 0 : i32
    return %c0_i32, %c0_i32_0 : i32, i32
  }
  func.func @transform_8(%arg0: i32) -> (i32, i32) {
    %c0_i32 = arith.constant 0 : i32
    %c0_i32_0 = arith.constant 0 : i32
    %c0_i32_1 = arith.constant 0 : i32
    return %c0_i32, %c0_i32_0 : i32, i32
  }
  func.func @transform_9(%arg0: i32) -> (i32, i32) {
    %c0_i32 = arith.constant 0 : i32
    %c0_i32_0 = arith.constant 0 : i32
    %c0_i32_1 = arith.constant 0 : i32
    return %c0_i32, %c0_i32_0 : i32, i32
  }
  func.func @transform_10(%arg0: i32) -> (i32, i32) {
    %c0_i32 = arith.constant 0 : i32
    %c0_i32_0 = arith.constant 0 : i32
    %c0_i32_1 = arith.constant 0 : i32
    return %c0_i32, %c0_i32_0 : i32, i32
  }
  func.func @transform_11(%arg0: i32) -> (i32, i32) {
    %c0_i32 = arith.constant 0 : i32
    %c0_i32_0 = arith.constant 0 : i32
    %c0_i32_1 = arith.constant 0 : i32
    return %c0_i32, %c0_i32_0 : i32, i32
  }
  func.func @transform_12(%arg0: i32) -> i32 {
    %c0_i32 = arith.constant 0 : i32
    %c0_i32_0 = arith.constant 0 : i32
    return %c0_i32 : i32
  }
  func.func @transform_13(%arg0: i32) -> (i32, i32, i32) {
    %c0_i32 = arith.constant 0 : i32
    %c0_i32_0 = arith.constant 0 : i32
    %c0_i32_1 = arith.constant 0 : i32
    return %arg0, %c0_i32, %c0_i32_0 : i32, i32, i32
  }
}

</mosaic_0001>

<llo_original>
// kernel: tpu_custom_call.1
$region0: #{tpu_custom_call.1}
  #allocation0 [shape = 'u32[]', space=smem, size = 0x4, offset = 0x4, fixed_abs, tag = 'smem constant byte address 0x4 - core index']
  #allocation1 [shape = 'u32[72,128]{1,0:T(1,128)}', space=vmem, size = 0x9000, scoped, tag = 'internal scratch']
  #allocation2 [shape = 'f32[1]{0:T(128)S(6)}', space=smem, size = 0x200, scoped, tag = 'scoped memory for tpu_custom_call.1']
  %s0 = inlined_call_operand.vmem [shape: f32[2,32,64], index: 0, kind: input, shape index: {}]
  %s1 = inlined_call_operand.vmem [shape: f32[1,32,64], index: 1, kind: input, shape index: {}]
  %s2 = inlined_call_operand.hbm [shape: f32[2,16,128], index: 2, kind: input, shape index: {}]
  %s3 = inlined_call_operand.vmem [shape: f32[2,16,1], index: 3, kind: input, shape index: {}]
  %s4 = inlined_call_operand.vmem [shape: f32[32,1], index: 4, kind: input, shape index: {}]
  %s5 = inlined_call_operand.vmem [shape: f32[32,1], index: 5, kind: input, shape index: {}]
  %s6 = inlined_call_operand.vmem [shape: f32[1,128], index: 6, kind: input, shape index: {}]
  %s7 = inlined_call_operand.vmem [shape: f32[1,128], index: 7, kind: input, shape index: {}]
  %s8 = inlined_call_operand.vmem [shape: f32[128,32], index: 8, kind: input, shape index: {}]
  %s9 = inlined_call_operand.vmem [shape: f32[128,128], index: 9, kind: input, shape index: {}]
  %s10 = inlined_call_operand.hbm [shape: f32[128,128], index: 10, kind: input, shape index: {}]
  %s11 = inlined_call_operand.hbm [shape: f32[32,128], index: 11, kind: input, shape index: {}]
  %s12 = inlined_call_operand.<no memory space> [shape: f32[1], index: 12, kind: input, shape index: {}]
  %s13 = inlined_call_operand.hbm [shape: f32[2,32,64], index: 13, kind: output, shape index: {}]
  %s14 = sld [smem:[#allocation0]]
  $region74: #{tpu_custom_call.1} parent=0
    _
  %s16 = ssub.s32 1, %s14
  %s17 = scalar_select 0, %s16, %s14
  %18 = sst [smem:[#allocation2]] %s12
  $region1: #{tpu_custom_call.1} parent=0
    #allocation3 [shape = 'u8[16384]{0}', space=vmem, size = 0x4000, scoped, tag = 'input window, operand 2, single buffered']
    #allocation4 [shape = 's32[1]{0}', space=sflag, size = 0x4, scoped, tag = 'scoped memory for tpu_custom_call.1']
    #allocation5 [shape = 's32[1]{0}', space=sflag, size = 0x4, scoped, tag = 'scoped memory for tpu_custom_call.1']
    #allocation6 [shape = 'u8[65536]{0}', space=vmem, size = 0x10000, scoped, tag = 'input window, operand 10, single buffered']
    #allocation7 [shape = 's32[1]{0}', space=sflag, size = 0x4, scoped, tag = 'scoped memory for tpu_custom_call.1']
    #allocation8 [shape = 'u8[16384]{0}', space=vmem, size = 0x4000, scoped, tag = 'input window, operand 11, single buffered']
    #allocation9 [shape = 'u8[32768]{0}', space=vmem, size = 0x8000, scoped, tag = 'output window, operand 0, single buffered']
    %19 = vsyncpa [#allocation4], 0
    %20 = vsyncpa [#allocation7], 0
    %21 = vsyncpa [#allocation5], 0
    // Predicated region
    $region2: #{tpu_custom_call.1} parent=1 // pred_check
      _
    $region3: #{tpu_custom_call.1} parent=1 // pred_check_branch
      %23 = sbr.rel (0) target = $region5
    $region4: #{tpu_custom_call.1} parent=1 // pred_region
      _
    $region5: #{tpu_custom_call.1} parent=1 // pred_fallthru
      _
    // Predicated region
    $region6: #{tpu_custom_call.1} parent=1 // pred_check
      _
    $region7: #{tpu_custom_call.1} parent=1 // pred_check_branch
      %25 = sbr.rel (0) target = $region9
    $region8: #{tpu_custom_call.1} parent=1 // pred_region
      _
    $region9: #{tpu_custom_call.1} parent=1 // pred_fallthru
      _
    // Predicated region
    $region10: #{tpu_custom_call.1} parent=1 // pred_check
      _
    $region11: #{tpu_custom_call.1} parent=1 // pred_check_branch
      %27 = sbr.rel (0) target = $region13
    $region12: #{tpu_custom_call.1} parent=1 // pred_region
      %29 = vsyncadd [#allocation4], 0
      %s30 = sshll.u32 %s2, 4
      %s31 = int_to_ptr.hbm [resolvable:$true] %s30
      %s32 = sshll.u32 [#allocation3], 4
      %s33 = int_to_ptr.vmem [resolvable:$true] %s32
      %38 = dma.hbm_to_vmem [thread:$0]  %s31, 512, %s33, [#allocation4], 128, 128, 8
    $region13: #{tpu_custom_call.1} parent=1 // pred_fallthru
      _
    // Predicated region
    $region14: #{tpu_custom_call.1} parent=1 // pred_check
      _
    $region15: #{tpu_custom_call.1} parent=1 // pred_check_branch
      %40 = sbr.rel (0) target = $region17
    $region16: #{tpu_custom_call.1} parent=1 // pred_region
      _
    $region17: #{tpu_custom_call.1} parent=1 // pred_fallthru
      _
    // Predicated region
    $region18: #{tpu_custom_call.1} parent=1 // pred_check
      _
    $region19: #{tpu_custom_call.1} parent=1 // pred_check_branch
      %42 = sbr.rel (0) target = $region21
    $region20: #{tpu_custom_call.1} parent=1 // pred_region
      _
    $region21: #{tpu_custom_call.1} parent=1 // pred_fallthru
      _
    // Predicated region
    $region22: #{tpu_custom_call.1} parent=1 // pred_check
      _
    $region23: #{tpu_custom_call.1} parent=1 // pred_check_branch
      %44 = sbr.rel (0) target = $region25
    $region24: #{tpu_custom_call.1} parent=1 // pred_region
      _
    $region25: #{tpu_custom_call.1} parent=1 // pred_fallthru
      _
    // Predicated region
    $region26: #{tpu_custom_call.1} parent=1 // pred_check
      _
    $region27: #{tpu_custom_call.1} parent=1 // pred_check_branch
      %46 = sbr.rel (0) target = $region29
    $region28: #{tpu_custom_call.1} parent=1 // pred_region
      _
    $region29: #{tpu_custom_call.1} parent=1 // pred_fallthru
      _
    // Predicated region
    $region30: #{tpu_custom_call.1} parent=1 // pred_check
      _
    $region31: #{tpu_custom_call.1} parent=1 // pred_check_branch
      %48 = sbr.rel (0) target = $region33
    $region32: #{tpu_custom_call.1} parent=1 // pred_region
      _
    $region33: #{tpu_custom_call.1} parent=1 // pred_fallthru
      _
    // Predicated region
    $region34: #{tpu_custom_call.1} parent=1 // pred_check
      _
    $region35: #{tpu_custom_call.1} parent=1 // pred_check_branch
      %50 = sbr.rel (0) target = $region37
    $region36: #{tpu_custom_call.1} parent=1 // pred_region
      _
    $region37: #{tpu_custom_call.1} parent=1 // pred_fallthru
      _
    // Predicated region
    $region38: #{tpu_custom_call.1} parent=1 // pred_check
      _
    $region39: #{tpu_custom_call.1} parent=1 // pred_check_branch
      %52 = sbr.rel (0) target = $region41
    $region40: #{tpu_custom_call.1} parent=1 // pred_region
      _
    $region41: #{tpu_custom_call.1} parent=1 // pred_fallthru
      _
    // Predicated region
    $region42: #{tpu_custom_call.1} parent=1 // pred_check
      _
    $region43: #{tpu_custom_call.1} parent=1 // pred_check_branch
      %54 = sbr.rel (0) target = $region45
    $region44: #{tpu_custom_call.1} parent=1 // pred_region
      %56 = vsyncadd [#allocation7], 0
      %s57 = sshll.u32 %s10, 4
      %s58 = int_to_ptr.hbm [resolvable:$true] %s57
      %s59 = sshll.u32 [#allocation6], 4
      %s60 = int_to_ptr.vmem [resolvable:$true] %s59
      %65 = dma.hbm_to_vmem [thread:$0]  %s58, 2048, %s60, [#allocation7], 128, 128, 8
    $region45: #{tpu_custom_call.1} parent=1 // pred_fallthru
      _
    // Predicated region
    $region46: #{tpu_custom_call.1} parent=1 // pred_check
      _
    $region47: #{tpu_custom_call.1} parent=1 // pred_check_branch
      %67 = sbr.rel (0) target = $region49
    $region48: #{tpu_custom_call.1} parent=1 // pred_region
      %69 = vsyncadd [#allocation7], 0
      %s70 = sshll.u32 %s11, 4
      %s71 = int_to_ptr.hbm [resolvable:$true] %s70
      %s72 = sshll.u32 [#allocation8], 4
      %s73 = int_to_ptr.vmem [resolvable:$true] %s72
      %78 = dma.hbm_to_vmem [thread:$0]  %s71, 512, %s73, [#allocation7], 128, 128, 8
    $region49: #{tpu_custom_call.1} parent=1 // pred_fallthru
      _
    // Predicated region
    $region50: #{tpu_custom_call.1} parent=1 // pred_check
      _
    $region51: #{tpu_custom_call.1} parent=1 // pred_check_branch
      %80 = sbr.rel (0) target = $region53
    $region52: #{tpu_custom_call.1} parent=1 // pred_region
      _
    $region53: #{tpu_custom_call.1} parent=1 // pred_fallthru
      _
    // Predicated region
    $region54: #{tpu_custom_call.1} parent=1 // pred_check
      _
    $region55: #{tpu_custom_call.1} parent=1 // pred_check_branch
      %82 = sbr.rel (0) target = $region57
    $region56: #{tpu_custom_call.1} parent=1 // pred_region
      %84 = dma.done [#allocation4], 512
    $region57: #{tpu_custom_call.1} parent=1 // pred_fallthru
      _
    // Predicated region
    $region58: #{tpu_custom_call.1} parent=1 // pred_check
      _
    $region59: #{tpu_custom_call.1} parent=1 // pred_check_branch
      %86 = sbr.rel (0) target = $region61
    $region60: #{tpu_custom_call.1} parent=1 // pred_region
      %88 = dma.done [#allocation7], 2048
    $region61: #{tpu_custom_call.1} parent=1 // pred_fallthru
      _
    // Predicated region
    $region62: #{tpu_custom_call.1} parent=1 // pred_check
      _
    $region63: #{tpu_custom_call.1} parent=1 // pred_check_branch
      %90 = sbr.rel (0) target = $region65
    $region64: #{tpu_custom_call.1} parent=1 // pred_region
      %92 = dma.done [#allocation7], 512
    $region65: #{tpu_custom_call.1} parent=1 // pred_fallthru
      _
    %s93 = sld [smem:[#allocation2]]
    %v94 = vld [vmem:[%s1] sm:$0xff]
    %v95 = vld [vmem:[%s1 + $0x8] sm:$0xff]
    %v96 = vld [vmem:[%s1 + $0x10] sm:$0xff]
    %v97 = vld [vmem:[%s1 + $0x18] sm:$0xff]
    %v98 = vld [vmem:[%s4] sm:$0xff]
    %v99 = vld [vmem:[%s4 + $0x8] sm:$0xff]
    %v100 = vld [vmem:[%s4 + $0x10] sm:$0xff]
    %v101 = vld [vmem:[%s4 + $0x18] sm:$0xff]
    %v102 = vld [vmem:[%s5] sm:$0xff]
    %v103 = vld [vmem:[%s5 + $0x8] sm:$0xff]
    %v104 = vld [vmem:[%s5 + $0x10] sm:$0xff]
    %v105 = vld [vmem:[%s5 + $0x18] sm:$0xff]
    %v106 = vld [vmem:[%s6] sm:$0x1]
    %v107 = vld [vmem:[%s7] sm:$0x1]
    %v108 = vld [vmem:[%s8] sm:$0xff]
    %v109 = vld [vmem:[%s8 + $0x8] sm:$0xff]
    %v110 = vld [vmem:[%s8 + $0x10] sm:$0xff]
    %v111 = vld [vmem:[%s8 + $0x18] sm:$0xff]
    %v112 = vld [vmem:[%s8 + $0x20] sm:$0xff]
    %v113 = vld [vmem:[%s8 + $0x28] sm:$0xff]
    %v114 = vld [vmem:[%s8 + $0x30] sm:$0xff]
    %v115 = vld [vmem:[%s8 + $0x38] sm:$0xff]
    %v116 = vld [vmem:[%s8 + $0x40] sm:$0xff]
    %v117 = vld [vmem:[%s8 + $0x48] sm:$0xff]
    %v118 = vld [vmem:[%s8 + $0x50] sm:$0xff]
    %v119 = vld [vmem:[%s8 + $0x58] sm:$0xff]
    %v120 = vld [vmem:[%s8 + $0x60] sm:$0xff]
    %v121 = vld [vmem:[%s8 + $0x68] sm:$0xff]
    %v122 = vld [vmem:[%s8 + $0x70] sm:$0xff]
    %v123 = vld [vmem:[%s8 + $0x78] sm:$0xff]
    %v124 = vld [vmem:[%s9] sm:$0xff]
    %v125 = vld [vmem:[%s9 + $0x8] sm:$0xff]
    %v126 = vld [vmem:[%s9 + $0x10] sm:$0xff]
    %v127 = vld [vmem:[%s9 + $0x18] sm:$0xff]
    %v128 = vld [vmem:[%s9 + $0x20] sm:$0xff]
    %v129 = vld [vmem:[%s9 + $0x28] sm:$0xff]
    %v130 = vld [vmem:[%s9 + $0x30] sm:$0xff]
    %v131 = vld [vmem:[%s9 + $0x38] sm:$0xff]
    %v132 = vld [vmem:[%s9 + $0x40] sm:$0xff]
    %v133 = vld [vmem:[%s9 + $0x48] sm:$0xff]
    %v134 = vld [vmem:[%s9 + $0x50] sm:$0xff]
    %v135 = vld [vmem:[%s9 + $0x58] sm:$0xff]
    %v136 = vld [vmem:[%s9 + $0x60] sm:$0xff]
    %v137 = vld [vmem:[%s9 + $0x68] sm:$0xff]
    %v138 = vld [vmem:[%s9 + $0x70] sm:$0xff]
    %v139 = vld [vmem:[%s9 + $0x78] sm:$0xff]
    %v140 = vld [vmem:[#allocation6] sm:$0xff]
    %v141 = vld [vmem:[#allocation6 + $0x8] sm:$0xff]
    %v142 = vld [vmem:[#allocation6 + $0x10] sm:$0xff]
    %v143 = vld [vmem:[#allocation6 + $0x18] sm:$0xff]
    %v144 = vld [vmem:[#allocation6 + $0x20] sm:$0xff]
    %v145 = vld [vmem:[#allocation6 + $0x28] sm:$0xff]
    %v146 = vld [vmem:[#allocation6 + $0x30] sm:$0xff]
    %v147 = vld [vmem:[#allocation6 + $0x38] sm:$0xff]
    %v148 = vld [vmem:[#allocation6 + $0x40] sm:$0xff]
    %v149 = vld [vmem:[#allocation6 + $0x48] sm:$0xff]
    %v150 = vld [vmem:[#allocation6 + $0x50] sm:$0xff]
    %v151 = vld [vmem:[#allocation6 + $0x58] sm:$0xff]
    %v152 = vld [vmem:[#allocation6 + $0x60] sm:$0xff]
    %v153 = vld [vmem:[#allocation6 + $0x68] sm:$0xff]
    %v154 = vld [vmem:[#allocation6 + $0x70] sm:$0xff]
    %v155 = vld [vmem:[#allocation6 + $0x78] sm:$0xff]
    %v156 = vld [vmem:[#allocation8] sm:$0xff]
    %v157 = vld [vmem:[#allocation8 + $0x8] sm:$0xff]
    %v158 = vld [vmem:[#allocation8 + $0x10] sm:$0xff]
    %v159 = vld [vmem:[#allocation8 + $0x18] sm:$0xff]
    %v160 = vld [vmem:[%s0] sm:$0xff]
    %v161 = vld [vmem:[%s0 + $0x8] sm:$0xff]
    %v162 = vld [vmem:[%s0 + $0x10] sm:$0xff]
    %v163 = vld [vmem:[%s0 + $0x18] sm:$0xff]
    %vm164 = vcmask 523264
    %v165 = vsel %vm164, %v160, 0.0
    %v166 = vsel %vm164, %v161, 0.0
    %v167 = vadd.f32 %v165, %v166
    %v168 = vsel %vm164, %v162, 0.0
    %v169 = vadd.f32 %v167, %v168
    %v170 = vsel %vm164, %v163, 0.0
    %v171 = vadd.f32 %v169, %v170
    %172 = vadd.xlane.f32.xlu0 %v171
    %v173 = vpop.xlane.xlu0 %172
    %v174 = vrot.slane %v173, 4
    %v175 = vadd.f32 %v173, %v174
    %v176 = vrot.slane %v175, 2
    %v177 = vadd.f32 %v175, %v176
    %v178 = vrot.slane %v177, 1
    %v179 = vadd.f32 %v177, %v178
    %s180 = vtos %v179
    %s181 = smul.f32 %s180, 0.00048828125
    %v182 = vmul.f32 %v160, %v160
    %v183 = vmul.f32 %v161, %v161
    %v184 = vmul.f32 %v162, %v162
    %v185 = vmul.f32 %v163, %v163
    %v186 = vsel %vm164, %v182, 0.0
    %v187 = vsel %vm164, %v183, 0.0
    %v188 = vadd.f32 %v186, %v187
    %v189 = vsel %vm164, %v184, 0.0
    %v190 = vadd.f32 %v188, %v189
    %v191 = vsel %vm164, %v185, 0.0
    %v192 = vadd.f32 %v190, %v191
    %193 = vadd.xlane.f32.xlu0 %v192
    %v194 = vpop.xlane.xlu0 %193
    %v195 = vrot.slane %v194, 4
    %v196 = vadd.f32 %v194, %v195
    %v197 = vrot.slane %v196, 2
    %v198 = vadd.f32 %v196, %v197
    %v199 = vrot.slane %v198, 1
    %v200 = vadd.f32 %v198, %v199
    %s201 = vtos %v200
    %s202 = smul.f32 %s201, 0.00048828125
    %s203 = smul.f32 %s181, %s181
    %s204 = ssub.f32 %s202, %s203
    %v205 = vstv %s181
    %v206 = vsub.f32 %v160, %v205
    %v207 = vsub.f32 %v161, %v205
    %v208 = vsub.f32 %v162, %v205
    %v209 = vsub.f32 %v163, %v205
    %s210 = sadd.f32 %s204, 1e-05
    %v211 = vstv %s210
    %v212 = vrsqrt.pop %v211
    %v213 = vmul.f32 %v212, %v211
    %v214 = vmul.f32 %v213, %v212
    %v215 = vmul.f32 0.5, %v214
    %v216 = vsub.f32 1.5, %v215
    %v217 = vmul.f32 %v212, %v216
    %vm218 = vweird.f32 %v211
    %vm219 = vweird.f32 %v212
    %vm220 = vmor %vm218, %vm219
    %v221 = vsel %vm220, %v212, %v217
    %s222 = vtos %v221
    %v223 = vstv %s222
    %v224 = vmul.f32 %v206, %v223
    %v225 = vmul.f32 %v207, %v223
    %v226 = vmul.f32 %v208, %v223
    %v227 = vmul.f32 %v209, %v223
    %229 = vset.pattern.permute.xlu0 0
    %230 = vperm.xlu0 %229, %v98
    %v231 = vpop.permute.xlu0 %230
    %234 = vset.pattern.permute.xlu0 0
    %235 = vperm.xlu0 %234, %v99
    %v236 = vpop.permute.xlu0 %235
    %239 = vset.pattern.permute.xlu0 0
    %240 = vperm.xlu0 %239, %v100
    %v241 = vpop.permute.xlu0 %240
    %244 = vset.pattern.permute.xlu0 0
    %245 = vperm.xlu0 %244, %v101
    %v246 = vpop.permute.xlu0 %245
    %v248 = vmul.f32 %v224, %v231
    %v249 = vmul.f32 %v225, %v236
    %v250 = vmul.f32 %v226, %v241
    %v251 = vmul.f32 %v227, %v246
    %253 = vset.pattern.permute.xlu0 0
    %254 = vperm.xlu0 %253, %v102
    %v255 = vpop.permute.xlu0 %254
    %258 = vset.pattern.permute.xlu0 0
    %259 = vperm.xlu0 %258, %v103
    %v260 = vpop.permute.xlu0 %259
    %263 = vset.pattern.permute.xlu0 0
    %264 = vperm.xlu0 %263, %v104
    %v265 = vpop.permute.xlu0 %264
    %268 = vset.pattern.permute.xlu0 0
    %269 = vperm.xlu0 %268, %v105
    %v270 = vpop.permute.xlu0 %269
    %v272 = vadd.f32 %v248, %v255
    %v273 = vadd.f32 %v249, %v260
    %v274 = vadd.f32 %v250, %v265
    %v275 = vadd.f32 %v251, %v270
    %v276 = vadd.f32 %v272, %v94
    %v277 = vadd.f32 %v273, %v95
    %v278 = vadd.f32 %v274, %v96
    %v279 = vadd.f32 %v275, %v97
    %v280 = vmul.f32 %v276, 0.17677669
    %v281 = vmul.f32 %v277, 0.17677669
    %v282 = vmul.f32 %v278, 0.17677669
    %v283 = vmul.f32 %v279, 0.17677669
    %vm284 = vcmask 261120
    %v286 = vsel %vm284, %v108, 0
    %v289 = vsel %vm284, %v109, 0
    %v292 = vsel %vm284, %v110, 0
    %v295 = vsel %vm284, %v111, 0
    %v298 = vsel %vm284, %v112, 0
    %v301 = vsel %vm284, %v113, 0
    %v304 = vsel %vm284, %v114, 0
    %v307 = vsel %vm284, %v115, 0
    %v310 = vsel %vm284, %v116, 0
    %v313 = vsel %vm284, %v117, 0
    %v316 = vsel %vm284, %v118, 0
    %v319 = vsel %vm284, %v119, 0
    %v322 = vsel %vm284, %v120, 0
    %v325 = vsel %vm284, %v121, 0
    %v328 = vsel %vm284, %v122, 0
    %v331 = vsel %vm284, %v123, 0
    %333 = vmatpush.msra.mxu0 0.0
    %334 = vmatpush.msra.mxu0 0.0
    %335 = vmatpush.msra.mxu0 0.0
    %336 = vmatpush.msra.mxu0 0.0
    %337 = vmatpush.msra.mxu0 0.0
    %338 = vmatpush.msra.mxu0 0.0
    %339 = vmatpush.msra.mxu0 0.0
    %340 = vmatpush.msra.mxu0 0.0
    %341 = vmatpush.msra.mxu0 0.0
    %342 = vmatpush.msra.mxu0 0.0
    %343 = vmatpush.msra.mxu0 0.0
    %344 = vmatpush.msra.mxu0 0.0
    %345 = vmatpush.msra.mxu0 %v283
    %346 = vmatpush.msra.mxu0 %v282
    %347 = vmatpush.msra.mxu0 %v281
    %348 = vmatpush.msra.mxu0 %v280
    %349 = vmatmul.f32.gmra.mxu0 %v286
    %v350 = vpop.f32.mrf.mxu0
    %v351 = vadd.f32 0.0, %v350
    %352 = vmatmul.f32.gmra.mxu0 %v289
    %v353 = vpop.f32.mrf.mxu0
    %v354 = vadd.f32 0.0, %v353
    %355 = vmatmul.f32.gmra.mxu0 %v292
    %v356 = vpop.f32.mrf.mxu0
    %v357 = vadd.f32 0.0, %v356
    %358 = vmatmul.f32.gmra.mxu0 %v295
    %v359 = vpop.f32.mrf.mxu0
    %v360 = vadd.f32 0.0, %v359
    %361 = vmatmul.f32.gmra.mxu0 %v298
    %v362 = vpop.f32.mrf.mxu0
    %v363 = vadd.f32 0.0, %v362
    %364 = vmatmul.f32.gmra.mxu0 %v301
    %v365 = vpop.f32.mrf.mxu0
    %v366 = vadd.f32 0.0, %v365
    %367 = vmatmul.f32.gmra.mxu0 %v304
    %v368 = vpop.f32.mrf.mxu0
    %v369 = vadd.f32 0.0, %v368
    %370 = vmatmul.f32.gmra.mxu0 %v307
    %v371 = vpop.f32.mrf.mxu0
    %v372 = vadd.f32 0.0, %v371
    %373 = vmatmul.f32.gmra.mxu0 %v310
    %v374 = vpop.f32.mrf.mxu0
    %v375 = vadd.f32 0.0, %v374
    %376 = vmatmul.f32.gmra.mxu0 %v313
    %v377 = vpop.f32.mrf.mxu0
    %v378 = vadd.f32 0.0, %v377
    %379 = vmatmul.f32.gmra.mxu0 %v316
    %v380 = vpop.f32.mrf.mxu0
    %v381 = vadd.f32 0.0, %v380
    %382 = vmatmul.f32.gmra.mxu0 %v319
    %v383 = vpop.f32.mrf.mxu0
    %v384 = vadd.f32 0.0, %v383
    %385 = vmatmul.f32.gmra.mxu0 %v322
    %v386 = vpop.f32.mrf.mxu0
    %v387 = vadd.f32 0.0, %v386
    %388 = vmatmul.f32.gmra.mxu0 %v325
    %v389 = vpop.f32.mrf.mxu0
    %v390 = vadd.f32 0.0, %v389
    %391 = vmatmul.f32.gmra.mxu0 %v328
    %v392 = vpop.f32.mrf.mxu0
    %v393 = vadd.f32 0.0, %v392
    %394 = vmatmul.f32.gmra.mxu0 %v331
    %v395 = vpop.f32.mrf.mxu0
    %v396 = vadd.f32 0.0, %v395
    %397 = vdwg.mxu0
    %v398 = vld [vmem:[#allocation3] sm:$0xff]
    %v399 = vld [vmem:[#allocation3 + $0x8] sm:$0xff]
    %400 = vadd.xlane.f32.xlu0 %v398
    %v401 = vpop.xlane.xlu0 %400
    %402 = vadd.xlane.f32.xlu0 %v399
    %v403 = vpop.xlane.xlu0 %402
    %v404 = vmul.f32 %v401, 0.0078125
    %v405 = vmul.f32 %v403, 0.0078125
    %v406 = vmul.f32 %v398, %v398
    %v407 = vmul.f32 %v399, %v399
    %408 = vadd.xlane.f32.xlu0 %v406
    %v409 = vpop.xlane.xlu0 %408
    %410 = vadd.xlane.f32.xlu0 %v407
    %v411 = vpop.xlane.xlu0 %410
    %v412 = vmul.f32 %v409, 0.0078125
    %v413 = vmul.f32 %v411, 0.0078125
    %v414 = vmul.f32 %v404, %v404
    %v415 = vmul.f32 %v405, %v405
    %v416 = vsub.f32 %v412, %v414
    %v417 = vsub.f32 %v413, %v415
    %v418 = vsub.f32 %v398, %v404
    %v419 = vsub.f32 %v399, %v405
    %v420 = vadd.f32 %v416, 1e-05
    %v421 = vadd.f32 %v417, 1e-05
    %v422 = vrsqrt.pop %v420
    %v423 = vmul.f32 %v422, %v420
    %v424 = vmul.f32 %v423, %v422
    %v425 = vmul.f32 0.5, %v424
    %v426 = vsub.f32 1.5, %v425
    %v427 = vmul.f32 %v422, %v426
    %vm428 = vweird.f32 %v420
    %vm429 = vweird.f32 %v422
    %vm430 = vmor %vm428, %vm429
    %v431 = vsel %vm430, %v422, %v427
    %v432 = vrsqrt.pop %v421
    %v433 = vmul.f32 %v432, %v421
    %v434 = vmul.f32 %v433, %v432
    %v435 = vmul.f32 0.5, %v434
    %v436 = vsub.f32 1.5, %v435
    %v437 = vmul.f32 %v432, %v436
    %vm438 = vweird.f32 %v421
    %vm439 = vweird.f32 %v432
    %vm440 = vmor %vm438, %vm439
    %v441 = vsel %vm440, %v432, %v437
    %v442 = vmul.f32 %v418, %v431
    %v443 = vmul.f32 %v419, %v441
    %v445 = vperm.slane %v106, 0
    %v447 = vmul.f32 %v442, %v445
    %v448 = vmul.f32 %v443, %v445
    %v450 = vperm.slane %v107, 0
    %v452 = vadd.f32 %v447, %v450
    %v453 = vadd.f32 %v448, %v450
    %454 = vmatpush.xpose.msra.mxu0 0.0
    %455 = vmatpush.xpose.msra.mxu0 0.0
    %456 = vmatpush.xpose.msra.mxu0 0.0
    %457 = vmatpush.xpose.msra.mxu0 0.0
    %458 = vmatpush.xpose.msra.mxu0 0.0
    %459 = vmatpush.xpose.msra.mxu0 0.0
    %460 = vmatpush.xpose.msra.mxu0 0.0
    %461 = vmatpush.xpose.msra.mxu0 0.0
    %462 = vmatpush.xpose.msra.mxu0 0.0
    %463 = vmatpush.xpose.msra.mxu0 0.0
    %464 = vmatpush.xpose.msra.mxu0 0.0
    %465 = vmatpush.xpose.msra.mxu0 0.0
    %466 = vmatpush.xpose.msra.mxu0 0.0
    %467 = vmatpush.xpose.msra.mxu0 0.0
    %468 = vmatpush.xpose.msra.mxu0 %v453
    %469 = vmatpush.xpose.msra.mxu0 %v452
    %470 = vmatmul.f32.gmra.mxu0 %v124
    %v471 = vpop.f32.mrf.mxu0
    %v472 = vadd.f32 0.0, %v471
    %473 = vmatmul.f32.gmra.mxu0 %v125
    %v474 = vpop.f32.mrf.mxu0
    %v475 = vadd.f32 0.0, %v474
    %476 = vmatmul.f32.gmra.mxu0 %v126
    %v477 = vpop.f32.mrf.mxu0
    %v478 = vadd.f32 0.0, %v477
    %479 = vmatmul.f32.gmra.mxu0 %v127
    %v480 = vpop.f32.mrf.mxu0
    %v481 = vadd.f32 0.0, %v480
    %482 = vmatmul.f32.gmra.mxu0 %v128
    %v483 = vpop.f32.mrf.mxu0
    %v484 = vadd.f32 0.0, %v483
    %485 = vmatmul.f32.gmra.mxu0 %v129
    %v486 = vpop.f32.mrf.mxu0
    %v487 = vadd.f32 0.0, %v486
    %488 = vmatmul.f32.gmra.mxu0 %v130
    %v489 = vpop.f32.mrf.mxu0
    %v490 = vadd.f32 0.0, %v489
    %491 = vmatmul.f32.gmra.mxu0 %v131
    %v492 = vpop.f32.mrf.mxu0
    %v493 = vadd.f32 0.0, %v492
    %494 = vmatmul.f32.gmra.mxu0 %v132
    %v495 = vpop.f32.mrf.mxu0
    %v496 = vadd.f32 0.0, %v495
    %497 = vmatmul.f32.gmra.mxu0 %v133
    %v498 = vpop.f32.mrf.mxu0
    %v499 = vadd.f32 0.0, %v498
    %500 = vmatmul.f32.gmra.mxu0 %v134
    %v501 = vpop.f32.mrf.mxu0
    %v502 = vadd.f32 0.0, %v501
    %503 = vmatmul.f32.gmra.mxu0 %v135
    %v504 = vpop.f32.mrf.mxu0
    %v505 = vadd.f32 0.0, %v504
    %506 = vmatmul.f32.gmra.mxu0 %v136
    %v507 = vpop.f32.mrf.mxu0
    %v508 = vadd.f32 0.0, %v507
    %509 = vmatmul.f32.gmra.mxu0 %v137
    %v510 = vpop.f32.mrf.mxu0
    %v511 = vadd.f32 0.0, %v510
    %512 = vmatmul.f32.gmra.mxu0 %v138
    %v513 = vpop.f32.mrf.mxu0
    %v514 = vadd.f32 0.0, %v513
    %515 = vmatmul.f32.gmra.mxu0 %v139
    %v516 = vpop.f32.mrf.mxu0
    %v517 = vadd.f32 0.0, %v516
    %518 = vdwg.mxu0
    %519 = vmatpush.xpose.msra.mxu0 0.0
    %520 = vmatpush.xpose.msra.mxu0 0.0
    %521 = vmatpush.xpose.msra.mxu0 0.0
    %522 = vmatpush.xpose.msra.mxu0 0.0
    %523 = vmatpush.xpose.msra.mxu0 0.0
    %524 = vmatpush.xpose.msra.mxu0 0.0
    %525 = vmatpush.xpose.msra.mxu0 0.0
    %526 = vmatpush.xpose.msra.mxu0 0.0
    %527 = vmatpush.xpose.msra.mxu0 0.0
    %528 = vmatpush.xpose.msra.mxu0 0.0
    %529 = vmatpush.xpose.msra.mxu0 0.0
    %530 = vmatpush.xpose.msra.mxu0 0.0
    %531 = vmatpush.xpose.msra.mxu0 0.0
    %532 = vmatpush.xpose.msra.mxu0 0.0
    %533 = vmatpush.xpose.msra.mxu0 %v453
    %534 = vmatpush.xpose.msra.mxu0 %v452
    %535 = vmatmul.f32.gmra.mxu0 %v140
    %v536 = vpop.f32.mrf.mxu0
    %v537 = vadd.f32 0.0, %v536
    %538 = vmatmul.f32.gmra.mxu0 %v141
    %v539 = vpop.f32.mrf.mxu0
    %v540 = vadd.f32 0.0, %v539
    %541 = vmatmul.f32.gmra.mxu0 %v142
    %v542 = vpop.f32.mrf.mxu0
    %v543 = vadd.f32 0.0, %v542
    %544 = vmatmul.f32.gmra.mxu0 %v143
    %v545 = vpop.f32.mrf.mxu0
    %v546 = vadd.f32 0.0, %v545
    %547 = vmatmul.f32.gmra.mxu0 %v144
    %v548 = vpop.f32.mrf.mxu0
    %v549 = vadd.f32 0.0, %v548
    %550 = vmatmul.f32.gmra.mxu0 %v145
    %v551 = vpop.f32.mrf.mxu0
    %v552 = vadd.f32 0.0, %v551
    %553 = vmatmul.f32.gmra.mxu0 %v146
    %v554 = vpop.f32.mrf.mxu0
    %v555 = vadd.f32 0.0, %v554
    %556 = vmatmul.f32.gmra.mxu0 %v147
    %v557 = vpop.f32.mrf.mxu0
    %v558 = vadd.f32 0.0, %v557
    %559 = vmatmul.f32.gmra.mxu0 %v148
    %v560 = vpop.f32.mrf.mxu0
    %v561 = vadd.f32 0.0, %v560
    %562 = vmatmul.f32.gmra.mxu0 %v149
    %v563 = vpop.f32.mrf.mxu0
    %v564 = vadd.f32 0.0, %v563
    %565 = vmatmul.f32.gmra.mxu0 %v150
    %v566 = vpop.f32.mrf.mxu0
    %v567 = vadd.f32 0.0, %v566
    %568 = vmatmul.f32.gmra.mxu0 %v151
    %v569 = vpop.f32.mrf.mxu0
    %v570 = vadd.f32 0.0, %v569
    %571 = vmatmul.f32.gmra.mxu0 %v152
    %v572 = vpop.f32.mrf.mxu0
    %v573 = vadd.f32 0.0, %v572
    %574 = vmatmul.f32.gmra.mxu0 %v153
    %v575 = vpop.f32.mrf.mxu0
    %v576 = vadd.f32 0.0, %v575
    %577 = vmatmul.f32.gmra.mxu0 %v154
    %v578 = vpop.f32.mrf.mxu0
    %v579 = vadd.f32 0.0, %v578
    %580 = vmatmul.f32.gmra.mxu0 %v155
    %v581 = vpop.f32.mrf.mxu0
    %v582 = vadd.f32 0.0, %v581
    %583 = vdwg.mxu0
    %v584 = vld [vmem:[%s3] sm:$0xff]
    %v585 = vld [vmem:[%s3 + $0x8] sm:$0xff]
    %587 = vset.pattern.permute.xlu0 0
    %588 = vperm.xlu0 %587, %v584
    %v589 = vpop.permute.xlu0 %588
    %592 = vset.pattern.permute.xlu0 0
    %593 = vperm.xlu0 %592, %v585
    %v594 = vpop.permute.xlu0 %593
    %596 = vxpose.xlu0.b32.start [1/16] %v472, 128
    %597 = vxpose.xlu0.b32.cont [2/16] %v475, 128
    %598 = vxpose.xlu0.b32.cont [3/16] %v478, 128
    %599 = vxpose.xlu0.b32.cont [4/16] %v481, 128
    %600 = vxpose.xlu0.b32.cont [5/16] 0.0, 128
    %601 = vxpose.xlu0.b32.cont [6/16] 0.0, 128
    %602 = vxpose.xlu0.b32.cont [7/16] 0.0, 128
    %603 = vxpose.xlu0.b32.cont [8/16] 0.0, 128
    %604 = vxpose.xlu0.b32.cont [9/16] 0.0, 128
    %605 = vxpose.xlu0.b32.cont [10/16] 0.0, 128
    %606 = vxpose.xlu0.b32.cont [11/16] 0.0, 128
    %607 = vxpose.xlu0.b32.cont [12/16] 0.0, 128
    %608 = vxpose.xlu0.b32.cont [13/16] 0.0, 128
    %609 = vxpose.xlu0.b32.cont [14/16] 0.0, 128
    %610 = vxpose.xlu0.b32.cont [15/16] 0.0, 128
    %611 = vxpose.xlu0.b32.end [16/16] 0.0, 128
    %v612 = vpop.trf.xlu0
    %v613 = vpop.trf.xlu0
    %v614 = vpop.trf.xlu0
    %v615 = vpop.trf.xlu0
    %v616 = vpop.trf.xlu0
    %v617 = vpop.trf.xlu0
    %v618 = vpop.trf.xlu0
    %v619 = vpop.trf.xlu0
    %v620 = vpop.trf.xlu0
    %v621 = vpop.trf.xlu0
    %v622 = vpop.trf.xlu0
    %v623 = vpop.trf.xlu0
    %v624 = vpop.trf.xlu0
    %v625 = vpop.trf.xlu0
    %v626 = vpop.trf.xlu0
    %v627 = vpop.trf.xlu0
    %v629 = vsel %vm284, %v612, 0
    %v632 = vsel %vm284, %v613, 0
    %634 = vmatpush.msra.mxu0 0.0
    %635 = vmatpush.msra.mxu0 0.0
    %636 = vmatpush.msra.mxu0 0.0
    %637 = vmatpush.msra.mxu0 0.0
    %638 = vmatpush.msra.mxu0 0.0
    %639 = vmatpush.msra.mxu0 0.0
    %640 = vmatpush.msra.mxu0 0.0
    %641 = vmatpush.msra.mxu0 0.0
    %642 = vmatpush.msra.mxu0 0.0
    %643 = vmatpush.msra.mxu0 0.0
    %644 = vmatpush.msra.mxu0 0.0
    %645 = vmatpush.msra.mxu0 0.0
    %646 = vmatpush.msra.mxu0 %v360
    %647 = vmatpush.msra.mxu0 %v357
    %648 = vmatpush.msra.mxu0 %v354
    %649 = vmatpush.msra.mxu0 %v351
    %650 = vmatmul.f32.gmra.mxu0 %v629
    %v651 = vpop.f32.mrf.mxu0
    %v652 = vadd.f32 %v589, %v651
    %653 = vmatmul.f32.gmra.mxu0 %v632
    %v654 = vpop.f32.mrf.mxu0
    %v655 = vadd.f32 %v594, %v654
    %656 = vdwg.mxu0
    %v657 = vsel %vm164, %v652, -inf
    %v658 = vsel %vm164, %v655, -inf
    %v659 = vmax.f32 %v657, %v658
    %v660 = vrot.slane %v659, 4
    %v661 = vmax.f32 %v659, %v660
    %v662 = vrot.slane %v661, 2
    %v663 = vmax.f32 %v661, %v662
    %v664 = vrot.slane %v663, 1
    %v665 = vmax.f32 %v663, %v664
    %v666 = vsub.f32 %v652, %v665
    %v667 = vsub.f32 %v655, %v665
    %v668 = vmul.f32 %v666, 1.442695
    %v669 = vpow.pop %v668
    %v670 = vmul.f32 %v667, 1.442695
    %v671 = vpow.pop %v670
    %v672 = vsel %vm164, %v669, 0.0
    %v673 = vsel %vm164, %v671, 0.0
    %v674 = vadd.f32 %v672, %v673
    %v675 = vrot.slane %v674, 4
    %v676 = vadd.f32 %v674, %v675
    %v677 = vrot.slane %v676, 2
    %v678 = vadd.f32 %v676, %v677
    %v679 = vrot.slane %v678, 1
    %v680 = vadd.f32 %v678, %v679
    %v681 = vrcp.pop %v680
    %v682 = vmul.f32 %v680, %v681
    %v683 = vsub.f32 1.0, %v682
    %v684 = vmul.f32 %v681, %v683
    %v685 = vadd.f32 %v681, %v684
    %vm686 = vweird.f32 %v680
    %vm687 = vweird.f32 %v681
    %vm688 = vmor %vm686, %vm687
    %v689 = vsel %vm688, %v681, %v685
    %v690 = vand.u32 2147483647, %v680
    %vm691 = vcmp.eq.f32.partialorder %v690, 8.507059e+37
    %v692 = vand.u32 %v680, 2147483648
    %v693 = vor.u32 1.1754944e-38, %v692
    %v694 = vsel %vm691, %v693, %v689
    %v695 = vmul.f32 %v669, %v694
    %v696 = vmul.f32 %v671, %v694
    %vm697 = vcmask 130048
    %v699 = vsel %vm697, %v537, 0
    %v702 = vsel %vm697, %v540, 0
    %v705 = vsel %vm697, %v543, 0
    %v708 = vsel %vm697, %v546, 0
    %710 = vmatpush.msra.mxu0 0.0
    %711 = vmatpush.msra.mxu0 0.0
    %712 = vmatpush.msra.mxu0 0.0
    %713 = vmatpush.msra.mxu0 0.0
    %714 = vmatpush.msra.mxu0 0.0
    %715 = vmatpush.msra.mxu0 0.0
    %716 = vmatpush.msra.mxu0 0.0
    %717 = vmatpush.msra.mxu0 0.0
    %718 = vmatpush.msra.mxu0 0.0
    %719 = vmatpush.msra.mxu0 0.0
    %720 = vmatpush.msra.mxu0 0.0
    %721 = vmatpush.msra.mxu0 0.0
    %722 = vmatpush.msra.mxu0 0.0
    %723 = vmatpush.msra.mxu0 0.0
    %724 = vmatpush.msra.mxu0 %v696
    %725 = vmatpush.msra.mxu0 %v695
    %726 = vmatmul.f32.gmra.mxu0 %v699
    %v727 = vpop.f32.mrf.mxu0
    %v728 = vadd.f32 0.0, %v727
    %729 = vmatmul.f32.gmra.mxu0 %v702
    %v730 = vpop.f32.mrf.mxu0
    %v731 = vadd.f32 0.0, %v730
    %732 = vmatmul.f32.gmra.mxu0 %v705
    %v733 = vpop.f32.mrf.mxu0
    %v734 = vadd.f32 0.0, %v733
    %735 = vmatmul.f32.gmra.mxu0 %v708
    %v736 = vpop.f32.mrf.mxu0
    %v737 = vadd.f32 0.0, %v736
    %738 = vdwg.mxu0
    %739 = vxpose.xlu0.b32.start [1/16] %v484, 128
    %740 = vxpose.xlu0.b32.cont [2/16] %v487, 128
    %741 = vxpose.xlu0.b32.cont [3/16] %v490, 128
    %742 = vxpose.xlu0.b32.cont [4/16] %v493, 128
    %743 = vxpose.xlu0.b32.cont [5/16] 0.0, 128
    %744 = vxpose.xlu0.b32.cont [6/16] 0.0, 128
    %745 = vxpose.xlu0.b32.cont [7/16] 0.0, 128
    %746 = vxpose.xlu0.b32.cont [8/16] 0.0, 128
    %747 = vxpose.xlu0.b32.cont [9/16] 0.0, 128
    %748 = vxpose.xlu0.b32.cont [10/16] 0.0, 128
    %749 = vxpose.xlu0.b32.cont [11/16] 0.0, 128
    %750 = vxpose.xlu0.b32.cont [12/16] 0.0, 128
    %751 = vxpose.xlu0.b32.cont [13/16] 0.0, 128
    %752 = vxpose.xlu0.b32.cont [14/16] 0.0, 128
    %753 = vxpose.xlu0.b32.cont [15/16] 0.0, 128
    %754 = vxpose.xlu0.b32.end [16/16] 0.0, 128
    %v755 = vpop.trf.xlu0
    %v756 = vpop.trf.xlu0
    %v757 = vpop.trf.xlu0
    %v758 = vpop.trf.xlu0
    %v759 = vpop.trf.xlu0
    %v760 = vpop.trf.xlu0
    %v761 = vpop.trf.xlu0
    %v762 = vpop.trf.xlu0
    %v763 = vpop.trf.xlu0
    %v764 = vpop.trf.xlu0
    %v765 = vpop.trf.xlu0
    %v766 = vpop.trf.xlu0
    %v767 = vpop.trf.xlu0
    %v768 = vpop.trf.xlu0
    %v769 = vpop.trf.xlu0
    %v770 = vpop.trf.xlu0
    %v772 = vsel %vm284, %v755, 0
    %v775 = vsel %vm284, %v756, 0
    %777 = vmatpush.msra.mxu0 0.0
    %778 = vmatpush.msra.mxu0 0.0
    %779 = vmatpush.msra.mxu0 0.0
    %780 = vmatpush.msra.mxu0 0.0
    %781 = vmatpush.msra.mxu0 0.0
    %782 = vmatpush.msra.mxu0 0.0
    %783 = vmatpush.msra.mxu0 0.0
    %784 = vmatpush.msra.mxu0 0.0
    %785 = vmatpush.msra.mxu0 0.0
    %786 = vmatpush.msra.mxu0 0.0
    %787 = vmatpush.msra.mxu0 0.0
    %788 = vmatpush.msra.mxu0 0.0
    %789 = vmatpush.msra.mxu0 %v372
    %790 = vmatpush.msra.mxu0 %v369
    %791 = vmatpush.msra.mxu0 %v366
    %792 = vmatpush.msra.mxu0 %v363
    %793 = vmatmul.f32.gmra.mxu0 %v772
    %v794 = vpop.f32.mrf.mxu0
    %v795 = vadd.f32 %v589, %v794
    %796 = vmatmul.f32.gmra.mxu0 %v775
    %v797 = vpop.f32.mrf.mxu0
    %v798 = vadd.f32 %v594, %v797
    %799 = vdwg.mxu0
    %v800 = vsel %vm164, %v795, -inf
    %v801 = vsel %vm164, %v798, -inf
    %v802 = vmax.f32 %v800, %v801
    %v803 = vrot.slane %v802, 4
    %v804 = vmax.f32 %v802, %v803
    %v805 = vrot.slane %v804, 2
    %v806 = vmax.f32 %v804, %v805
    %v807 = vrot.slane %v806, 1
    %v808 = vmax.f32 %v806, %v807
    %v809 = vsub.f32 %v795, %v808
    %v810 = vsub.f32 %v798, %v808
    %v811 = vmul.f32 %v809, 1.442695
    %v812 = vpow.pop %v811
    %v813 = vmul.f32 %v810, 1.442695
    %v814 = vpow.pop %v813
    %v815 = vsel %vm164, %v812, 0.0
    %v816 = vsel %vm164, %v814, 0.0
    %v817 = vadd.f32 %v815, %v816
    %v818 = vrot.slane %v817, 4
    %v819 = vadd.f32 %v817, %v818
    %v820 = vrot.slane %v819, 2
    %v821 = vadd.f32 %v819, %v820
    %v822 = vrot.slane %v821, 1
    %v823 = vadd.f32 %v821, %v822
    %v824 = vrcp.pop %v823
    %v825 = vmul.f32 %v823, %v824
    %v826 = vsub.f32 1.0, %v825
    %v827 = vmul.f32 %v824, %v826
    %v828 = vadd.f32 %v824, %v827
    %vm829 = vweird.f32 %v823
    %vm830 = vweird.f32 %v824
    %vm831 = vmor %vm829, %vm830
    %v832 = vsel %vm831, %v824, %v828
    %v833 = vand.u32 2147483647, %v823
    %vm834 = vcmp.eq.f32.partialorder %v833, 8.507059e+37
    %v835 = vand.u32 %v823, 2147483648
    %v836 = vor.u32 1.1754944e-38, %v835
    %v837 = vsel %vm834, %v836, %v832
    %v838 = vmul.f32 %v812, %v837
    %v839 = vmul.f32 %v814, %v837
    %v841 = vsel %vm697, %v549, 0
    %v844 = vsel %vm697, %v552, 0
    %v847 = vsel %vm697, %v555, 0
    %v850 = vsel %vm697, %v558, 0
    %852 = vmatpush.msra.mxu0 0.0
    %853 = vmatpush.msra.mxu0 0.0
    %854 = vmatpush.msra.mxu0 0.0
    %855 = vmatpush.msra.mxu0 0.0
    %856 = vmatpush.msra.mxu0 0.0
    %857 = vmatpush.msra.mxu0 0.0
    %858 = vmatpush.msra.mxu0 0.0
    %859 = vmatpush.msra.mxu0 0.0
    %860 = vmatpush.msra.mxu0 0.0
    %861 = vmatpush.msra.mxu0 0.0
    %862 = vmatpush.msra.mxu0 0.0
    %863 = vmatpush.msra.mxu0 0.0
    %864 = vmatpush.msra.mxu0 0.0
    %865 = vmatpush.msra.mxu0 0.0
    %866 = vmatpush.msra.mxu0 %v839
    %867 = vmatpush.msra.mxu0 %v838
    %868 = vmatmul.f32.gmra.mxu0 %v841
    %v869 = vpop.f32.mrf.mxu0
    %v870 = vadd.f32 0.0, %v869
    %871 = vmatmul.f32.gmra.mxu0 %v844
    %v872 = vpop.f32.mrf.mxu0
    %v873 = vadd.f32 0.0, %v872
    %874 = vmatmul.f32.gmra.mxu0 %v847
    %v875 = vpop.f32.mrf.mxu0
    %v876 = vadd.f32 0.0, %v875
    %877 = vmatmul.f32.gmra.mxu0 %v850
    %v878 = vpop.f32.mrf.mxu0
    %v879 = vadd.f32 0.0, %v878
    %880 = vdwg.mxu0
    %881 = vxpose.xlu0.b32.start [1/16] %v496, 128
    %882 = vxpose.xlu0.b32.cont [2/16] %v499, 128
    %883 = vxpose.xlu0.b32.cont [3/16] %v502, 128
    %884 = vxpose.xlu0.b32.cont [4/16] %v505, 128
    %885 = vxpose.xlu0.b32.cont [5/16] 0.0, 128
    %886 = vxpose.xlu0.b32.cont [6/16] 0.0, 128
    %887 = vxpose.xlu0.b32.cont [7/16] 0.0, 128
    %888 = vxpose.xlu0.b32.cont [8/16] 0.0, 128
    %889 = vxpose.xlu0.b32.cont [9/16] 0.0, 128
    %890 = vxpose.xlu0.b32.cont [10/16] 0.0, 128
    %891 = vxpose.xlu0.b32.cont [11/16] 0.0, 128
    %892 = vxpose.xlu0.b32.cont [12/16] 0.0, 128
    %893 = vxpose.xlu0.b32.cont [13/16] 0.0, 128
    %894 = vxpose.xlu0.b32.cont [14/16] 0.0, 128
    %895 = vxpose.xlu0.b32.cont [15/16] 0.0, 128
    %896 = vxpose.xlu0.b32.end [16/16] 0.0, 128
    %v897 = vpop.trf.xlu0
    %v898 = vpop.trf.xlu0
    %v899 = vpop.trf.xlu0
    %v900 = vpop.trf.xlu0
    %v901 = vpop.trf.xlu0
    %v902 = vpop.trf.xlu0
    %v903 = vpop.trf.xlu0
    %v904 = vpop.trf.xlu0
    %v905 = vpop.trf.xlu0
    %v906 = vpop.trf.xlu0
    %v907 = vpop.trf.xlu0
    %v908 = vpop.trf.xlu0
    %v909 = vpop.trf.xlu0
    %v910 = vpop.trf.xlu0
    %v911 = vpop.trf.xlu0
    %v912 = vpop.trf.xlu0
    %v914 = vsel %vm284, %v897, 0
    %v917 = vsel %vm284, %v898, 0
    %919 = vmatpush.msra.mxu0 0.0
    %920 = vmatpush.msra.mxu0 0.0
    %921 = vmatpush.msra.mxu0 0.0
    %922 = vmatpush.msra.mxu0 0.0
    %923 = vmatpush.msra.mxu0 0.0
    %924 = vmatpush.msra.mxu0 0.0
    %925 = vmatpush.msra.mxu0 0.0
    %926 = vmatpush.msra.mxu0 0.0
    %927 = vmatpush.msra.mxu0 0.0
    %928 = vmatpush.msra.mxu0 0.0
    %929 = vmatpush.msra.mxu0 0.0
    %930 = vmatpush.msra.mxu0 0.0
    %931 = vmatpush.msra.mxu0 %v384
    %932 = vmatpush.msra.mxu0 %v381
    %933 = vmatpush.msra.mxu0 %v378
    %934 = vmatpush.msra.mxu0 %v375
    %935 = vmatmul.f32.gmra.mxu0 %v914
    %v936 = vpop.f32.mrf.mxu0
    %v937 = vadd.f32 %v589, %v936
    %938 = vmatmul.f32.gmra.mxu0 %v917
    %v939 = vpop.f32.mrf.mxu0
    %v940 = vadd.f32 %v594, %v939
    %941 = vdwg.mxu0
    %v942 = vsel %vm164, %v937, -inf
    %v943 = vsel %vm164, %v940, -inf
    %v944 = vmax.f32 %v942, %v943
    %v945 = vrot.slane %v944, 4
    %v946 = vmax.f32 %v944, %v945
    %v947 = vrot.slane %v946, 2
    %v948 = vmax.f32 %v946, %v947
    %v949 = vrot.slane %v948, 1
    %v950 = vmax.f32 %v948, %v949
    %v951 = vsub.f32 %v937, %v950
    %v952 = vsub.f32 %v940, %v950
    %v953 = vmul.f32 %v951, 1.442695
    %v954 = vpow.pop %v953
    %v955 = vmul.f32 %v952, 1.442695
    %v956 = vpow.pop %v955
    %v957 = vsel %vm164, %v954, 0.0
    %v958 = vsel %vm164, %v956, 0.0
    %v959 = vadd.f32 %v957, %v958
    %v960 = vrot.slane %v959, 4
    %v961 = vadd.f32 %v959, %v960
    %v962 = vrot.slane %v961, 2
    %v963 = vadd.f32 %v961, %v962
    %v964 = vrot.slane %v963, 1
    %v965 = vadd.f32 %v963, %v964
    %v966 = vrcp.pop %v965
    %v967 = vmul.f32 %v965, %v966
    %v968 = vsub.f32 1.0, %v967
    %v969 = vmul.f32 %v966, %v968
    %v970 = vadd.f32 %v966, %v969
    %vm971 = vweird.f32 %v965
    %vm972 = vweird.f32 %v966
    %vm973 = vmor %vm971, %vm972
    %v974 = vsel %vm973, %v966, %v970
    %v975 = vand.u32 2147483647, %v965
    %vm976 = vcmp.eq.f32.partialorder %v975, 8.507059e+37
    %v977 = vand.u32 %v965, 2147483648
    %v978 = vor.u32 1.1754944e-38, %v977
    %v979 = vsel %vm976, %v978, %v974
    %v980 = vmul.f32 %v954, %v979
    %v981 = vmul.f32 %v956, %v979
    %v983 = vsel %vm697, %v561, 0
    %v986 = vsel %vm697, %v564, 0
    %v989 = vsel %vm697, %v567, 0
    %v992 = vsel %vm697, %v570, 0
    %994 = vmatpush.msra.mxu0 0.0
    %995 = vmatpush.msra.mxu0 0.0
    %996 = vmatpush.msra.mxu0 0.0
    %997 = vmatpush.msra.mxu0 0.0
    %998 = vmatpush.msra.mxu0 0.0
    %999 = vmatpush.msra.mxu0 0.0
    %1000 = vmatpush.msra.mxu0 0.0
    %1001 = vmatpush.msra.mxu0 0.0
    %1002 = vmatpush.msra.mxu0 0.0
    %1003 = vmatpush.msra.mxu0 0.0
    %1004 = vmatpush.msra.mxu0 0.0
    %1005 = vmatpush.msra.mxu0 0.0
    %1006 = vmatpush.msra.mxu0 0.0
    %1007 = vmatpush.msra.mxu0 0.0
    %1008 = vmatpush.msra.mxu0 %v981
    %1009 = vmatpush.msra.mxu0 %v980
    %1010 = vmatmul.f32.gmra.mxu0 %v983
    %v1011 = vpop.f32.mrf.mxu0
    %v1012 = vadd.f32 0.0, %v1011
    %1013 = vmatmul.f32.gmra.mxu0 %v986
    %v1014 = vpop.f32.mrf.mxu0
    %v1015 = vadd.f32 0.0, %v1014
    %1016 = vmatmul.f32.gmra.mxu0 %v989
    %v1017 = vpop.f32.mrf.mxu0
    %v1018 = vadd.f32 0.0, %v1017
    %1019 = vmatmul.f32.gmra.mxu0 %v992
    %v1020 = vpop.f32.mrf.mxu0
    %v1021 = vadd.f32 0.0, %v1020
    %1022 = vdwg.mxu0
    %1023 = vxpose.xlu0.b32.start [1/16] %v508, 128
    %1024 = vxpose.xlu0.b32.cont [2/16] %v511, 128
    %1025 = vxpose.xlu0.b32.cont [3/16] %v514, 128
    %1026 = vxpose.xlu0.b32.cont [4/16] %v517, 128
    %1027 = vxpose.xlu0.b32.cont [5/16] 0.0, 128
    %1028 = vxpose.xlu0.b32.cont [6/16] 0.0, 128
    %1029 = vxpose.xlu0.b32.cont [7/16] 0.0, 128
    %1030 = vxpose.xlu0.b32.cont [8/16] 0.0, 128
    %1031 = vxpose.xlu0.b32.cont [9/16] 0.0, 128
    %1032 = vxpose.xlu0.b32.cont [10/16] 0.0, 128
    %1033 = vxpose.xlu0.b32.cont [11/16] 0.0, 128
    %1034 = vxpose.xlu0.b32.cont [12/16] 0.0, 128
    %1035 = vxpose.xlu0.b32.cont [13/16] 0.0, 128
    %1036 = vxpose.xlu0.b32.cont [14/16] 0.0, 128
    %1037 = vxpose.xlu0.b32.cont [15/16] 0.0, 128
    %1038 = vxpose.xlu0.b32.end [16/16] 0.0, 128
    %v1039 = vpop.trf.xlu0
    %v1040 = vpop.trf.xlu0
    %v1041 = vpop.trf.xlu0
    %v1042 = vpop.trf.xlu0
    %v1043 = vpop.trf.xlu0
    %v1044 = vpop.trf.xlu0
    %v1045 = vpop.trf.xlu0
    %v1046 = vpop.trf.xlu0
    %v1047 = vpop.trf.xlu0
    %v1048 = vpop.trf.xlu0
    %v1049 = vpop.trf.xlu0
    %v1050 = vpop.trf.xlu0
    %v1051 = vpop.trf.xlu0
    %v1052 = vpop.trf.xlu0
    %v1053 = vpop.trf.xlu0
    %v1054 = vpop.trf.xlu0
    %v1056 = vsel %vm284, %v1039, 0
    %v1059 = vsel %vm284, %v1040, 0
    %1061 = vmatpush.msra.mxu0 0.0
    %1062 = vmatpush.msra.mxu0 0.0
    %1063 = vmatpush.msra.mxu0 0.0
    %1064 = vmatpush.msra.mxu0 0.0
    %1065 = vmatpush.msra.mxu0 0.0
    %1066 = vmatpush.msra.mxu0 0.0
    %1067 = vmatpush.msra.mxu0 0.0
    %1068 = vmatpush.msra.mxu0 0.0
    %1069 = vmatpush.msra.mxu0 0.0
    %1070 = vmatpush.msra.mxu0 0.0
    %1071 = vmatpush.msra.mxu0 0.0
    %1072 = vmatpush.msra.mxu0 0.0
    %1073 = vmatpush.msra.mxu0 %v396
    %1074 = vmatpush.msra.mxu0 %v393
    %1075 = vmatpush.msra.mxu0 %v390
    %1076 = vmatpush.msra.mxu0 %v387
    %1077 = vmatmul.f32.gmra.mxu0 %v1056
    %v1078 = vpop.f32.mrf.mxu0
    %v1079 = vadd.f32 %v589, %v1078
    %1080 = vmatmul.f32.gmra.mxu0 %v1059
    %v1081 = vpop.f32.mrf.mxu0
    %v1082 = vadd.f32 %v594, %v1081
    %1083 = vdwg.mxu0
    %v1084 = vsel %vm164, %v1079, -inf
    %v1085 = vsel %vm164, %v1082, -inf
    %v1086 = vmax.f32 %v1084, %v1085
    %v1087 = vrot.slane %v1086, 4
    %v1088 = vmax.f32 %v1086, %v1087
    %v1089 = vrot.slane %v1088, 2
    %v1090 = vmax.f32 %v1088, %v1089
    %v1091 = vrot.slane %v1090, 1
    %v1092 = vmax.f32 %v1090, %v1091
    %v1093 = vsub.f32 %v1079, %v1092
    %v1094 = vsub.f32 %v1082, %v1092
    %v1095 = vmul.f32 %v1093, 1.442695
    %v1096 = vpow.pop %v1095
    %v1097 = vmul.f32 %v1094, 1.442695
    %v1098 = vpow.pop %v1097
    %v1099 = vsel %vm164, %v1096, 0.0
    %v1100 = vsel %vm164, %v1098, 0.0
    %v1101 = vadd.f32 %v1099, %v1100
    %v1102 = vrot.slane %v1101, 4
    %v1103 = vadd.f32 %v1101, %v1102
    %v1104 = vrot.slane %v1103, 2
    %v1105 = vadd.f32 %v1103, %v1104
    %v1106 = vrot.slane %v1105, 1
    %v1107 = vadd.f32 %v1105, %v1106
    %v1108 = vrcp.pop %v1107
    %v1109 = vmul.f32 %v1107, %v1108
    %v1110 = vsub.f32 1.0, %v1109
    %v1111 = vmul.f32 %v1108, %v1110
    %v1112 = vadd.f32 %v1108, %v1111
    %vm1113 = vweird.f32 %v1107
    %vm1114 = vweird.f32 %v1108
    %vm1115 = vmor %vm1113, %vm1114
    %v1116 = vsel %vm1115, %v1108, %v1112
    %v1117 = vand.u32 2147483647, %v1107
    %vm1118 = vcmp.eq.f32.partialorder %v1117, 8.507059e+37
    %v1119 = vand.u32 %v1107, 2147483648
    %v1120 = vor.u32 1.1754944e-38, %v1119
    %v1121 = vsel %vm1118, %v1120, %v1116
    %v1122 = vmul.f32 %v1096, %v1121
    %v1123 = vmul.f32 %v1098, %v1121
    %v1125 = vsel %vm697, %v573, 0
    %v1128 = vsel %vm697, %v576, 0
    %v1131 = vsel %vm697, %v579, 0
    %v1134 = vsel %vm697, %v582, 0
    %1136 = vmatpush.msra.mxu0 0.0
    %1137 = vmatpush.msra.mxu0 0.0
    %1138 = vmatpush.msra.mxu0 0.0
    %1139 = vmatpush.msra.mxu0 0.0
    %1140 = vmatpush.msra.mxu0 0.0
    %1141 = vmatpush.msra.mxu0 0.0
    %1142 = vmatpush.msra.mxu0 0.0
    %1143 = vmatpush.msra.mxu0 0.0
    %1144 = vmatpush.msra.mxu0 0.0
    %1145 = vmatpush.msra.mxu0 0.0
    %1146 = vmatpush.msra.mxu0 0.0
    %1147 = vmatpush.msra.mxu0 0.0
    %1148 = vmatpush.msra.mxu0 0.0
    %1149 = vmatpush.msra.mxu0 0.0
    %1150 = vmatpush.msra.mxu0 %v1123
    %1151 = vmatpush.msra.mxu0 %v1122
    %1152 = vmatmul.f32.gmra.mxu0 %v1125
    %v1153 = vpop.f32.mrf.mxu0
    %v1154 = vadd.f32 0.0, %v1153
    %1155 = vmatmul.f32.gmra.mxu0 %v1128
    %v1156 = vpop.f32.mrf.mxu0
    %v1157 = vadd.f32 0.0, %v1156
    %1158 = vmatmul.f32.gmra.mxu0 %v1131
    %v1159 = vpop.f32.mrf.mxu0
    %v1160 = vadd.f32 0.0, %v1159
    %1161 = vmatmul.f32.gmra.mxu0 %v1134
    %v1162 = vpop.f32.mrf.mxu0
    %v1163 = vadd.f32 0.0, %v1162
    %1164 = vdwg.mxu0
    %1165 = vmatpush.msra.mxu0 %v1163
    %1166 = vmatpush.msra.mxu0 %v1160
    %1167 = vmatpush.msra.mxu0 %v1157
    %1168 = vmatpush.msra.mxu0 %v1154
    %1169 = vmatpush.msra.mxu0 %v1021
    %1170 = vmatpush.msra.mxu0 %v1018
    %1171 = vmatpush.msra.mxu0 %v1015
    %1172 = vmatpush.msra.mxu0 %v1012
    %1173 = vmatpush.msra.mxu0 %v879
    %1174 = vmatpush.msra.mxu0 %v876
    %1175 = vmatpush.msra.mxu0 %v873
    %1176 = vmatpush.msra.mxu0 %v870
    %1177 = vmatpush.msra.mxu0 %v737
    %1178 = vmatpush.msra.mxu0 %v734
    %1179 = vmatpush.msra.mxu0 %v731
    %1180 = vmatpush.msra.mxu0 %v728
    %1181 = vmatmul.f32.gmra.mxu0 %v156
    %v1182 = vpop.f32.mrf.mxu0
    %v1183 = vadd.f32 0.0, %v1182
    %1184 = vmatmul.f32.gmra.mxu0 %v157
    %v1185 = vpop.f32.mrf.mxu0
    %v1186 = vadd.f32 0.0, %v1185
    %1187 = vmatmul.f32.gmra.mxu0 %v158
    %v1188 = vpop.f32.mrf.mxu0
    %v1189 = vadd.f32 0.0, %v1188
    %1190 = vmatmul.f32.gmra.mxu0 %v159
    %v1191 = vpop.f32.mrf.mxu0
    %v1192 = vadd.f32 0.0, %v1191
    %1193 = vdwg.mxu0
    %v1194 = vstv %s93
    %v1195 = vmul.f32 %v1194, %v1183
    %v1196 = vmul.f32 %v1194, %v1186
    %v1197 = vmul.f32 %v1194, %v1189
    %v1198 = vmul.f32 %v1194, %v1192
    %v1199 = vadd.f32 %v160, %v1195
    %v1200 = vadd.f32 %v161, %v1196
    %v1201 = vadd.f32 %v162, %v1197
    %v1202 = vadd.f32 %v163, %v1198
    %1203 = vst.msk [vmem:[#allocation9] sm:$0xff] %vm164, %v1199
    %1204 = vst.msk [vmem:[#allocation9 + $0x8] sm:$0xff] %vm164, %v1200
    %1205 = vst.msk [vmem:[#allocation9 + $0x10] sm:$0xff] %vm164, %v1201
    %1206 = vst.msk [vmem:[#allocation9 + $0x18] sm:$0xff] %vm164, %v1202
    %s1207 = scalar_lea.vmem %s0, 32
    %v1208 = vld [vmem:[%s1207] sm:$0xff]
    %v1209 = vld [vmem:[%s1207 + $0x8] sm:$0xff]
    %v1210 = vld [vmem:[%s1207 + $0x10] sm:$0xff]
    %v1211 = vld [vmem:[%s1207 + $0x18] sm:$0xff]
    %v1212 = vsel %vm164, %v1208, 0.0
    %v1213 = vsel %vm164, %v1209, 0.0
    %v1214 = vadd.f32 %v1212, %v1213
    %v1215 = vsel %vm164, %v1210, 0.0
    %v1216 = vadd.f32 %v1214, %v1215
    %v1217 = vsel %vm164, %v1211, 0.0
    %v1218 = vadd.f32 %v1216, %v1217
    %1219 = vadd.xlane.f32.xlu0 %v1218
    %v1220 = vpop.xlane.xlu0 %1219
    %v1221 = vrot.slane %v1220, 4
    %v1222 = vadd.f32 %v1220, %v1221
    %v1223 = vrot.slane %v1222, 2
    %v1224 = vadd.f32 %v1222, %v1223
    %v1225 = vrot.slane %v1224, 1
    %v1226 = vadd.f32 %v1224, %v1225
    %s1227 = vtos %v1226
    %s1228 = smul.f32 %s1227, 0.00048828125
    %v1229 = vmul.f32 %v1208, %v1208
    %v1230 = vmul.f32 %v1209, %v1209
    %v1231 = vmul.f32 %v1210, %v1210
    %v1232 = vmul.f32 %v1211, %v1211
    %v1233 = vsel %vm164, %v1229, 0.0
    %v1234 = vsel %vm164, %v1230, 0.0
    %v1235 = vadd.f32 %v1233, %v1234
    %v1236 = vsel %vm164, %v1231, 0.0
    %v1237 = vadd.f32 %v1235, %v1236
    %v1238 = vsel %vm164, %v1232, 0.0
    %v1239 = vadd.f32 %v1237, %v1238
    %1240 = vadd.xlane.f32.xlu0 %v1239
    %v1241 = vpop.xlane.xlu0 %1240
    %v1242 = vrot.slane %v1241, 4
    %v1243 = vadd.f32 %v1241, %v1242
    %v1244 = vrot.slane %v1243, 2
    %v1245 = vadd.f32 %v1243, %v1244
    %v1246 = vrot.slane %v1245, 1
    %v1247 = vadd.f32 %v1245, %v1246
    %s1248 = vtos %v1247
    %s1249 = smul.f32 %s1248, 0.00048828125
    %s1250 = smul.f32 %s1228, %s1228
    %s1251 = ssub.f32 %s1249, %s1250
    %v1252 = vstv %s1228
    %v1253 = vsub.f32 %v1208, %v1252
    %v1254 = vsub.f32 %v1209, %v1252
    %v1255 = vsub.f32 %v1210, %v1252
    %v1256 = vsub.f32 %v1211, %v1252
    %s1257 = sadd.f32 %s1251, 1e-05
    %v1258 = vstv %s1257
    %v1259 = vrsqrt.pop %v1258
    %v1260 = vmul.f32 %v1259, %v1258
    %v1261 = vmul.f32 %v1260, %v1259
    %v1262 = vmul.f32 0.5, %v1261
    %v1263 = vsub.f32 1.5, %v1262
    %v1264 = vmul.f32 %v1259, %v1263
    %vm1265 = vweird.f32 %v1258
    %vm1266 = vweird.f32 %v1259
    %vm1267 = vmor %vm1265, %vm1266
    %v1268 = vsel %vm1267, %v1259, %v1264
    %s1269 = vtos %v1268
    %v1270 = vstv %s1269
    %v1271 = vmul.f32 %v1253, %v1270
    %v1272 = vmul.f32 %v1254, %v1270
    %v1273 = vmul.f32 %v1255, %v1270
    %v1274 = vmul.f32 %v1256, %v1270
    %v1275 = vmul.f32 %v1271, %v231
    %v1276 = vmul.f32 %v1272, %v236
    %v1277 = vmul.f32 %v1273, %v241
    %v1278 = vmul.f32 %v1274, %v246
    %v1279 = vadd.f32 %v1275, %v255
    %v1280 = vadd.f32 %v1276, %v260
    %v1281 = vadd.f32 %v1277, %v265
    %v1282 = vadd.f32 %v1278, %v270
    %v1283 = vadd.f32 %v1279, %v94
    %v1284 = vadd.f32 %v1280, %v95
    %v1285 = vadd.f32 %v1281, %v96
    %v1286 = vadd.f32 %v1282, %v97
    %v1287 = vmul.f32 %v1283, 0.17677669
    %v1288 = vmul.f32 %v1284, 0.17677669
    %v1289 = vmul.f32 %v1285, 0.17677669
    %v1290 = vmul.f32 %v1286, 0.17677669
    %1291 = vmatpush.msra.mxu0 0.0
    %1292 = vmatpush.msra.mxu0 0.0
    %1293 = vmatpush.msra.mxu0 0.0
    %1294 = vmatpush.msra.mxu0 0.0
    %1295 = vmatpush.msra.mxu0 0.0
    %1296 = vmatpush.msra.mxu0 0.0
    %1297 = vmatpush.msra.mxu0 0.0
    %1298 = vmatpush.msra.mxu0 0.0
    %1299 = vmatpush.msra.mxu0 0.0
    %1300 = vmatpush.msra.mxu0 0.0
    %1301 = vmatpush.msra.mxu0 0.0
    %1302 = vmatpush.msra.mxu0 0.0
    %1303 = vmatpush.msra.mxu0 %v1290
    %1304 = vmatpush.msra.mxu0 %v1289
    %1305 = vmatpush.msra.mxu0 %v1288
    %1306 = vmatpush.msra.mxu0 %v1287
    %1307 = vmatmul.f32.gmra.mxu0 %v286
    %v1308 = vpop.f32.mrf.mxu0
    %v1309 = vadd.f32 0.0, %v1308
    %1310 = vmatmul.f32.gmra.mxu0 %v289
    %v1311 = vpop.f32.mrf.mxu0
    %v1312 = vadd.f32 0.0, %v1311
    %1313 = vmatmul.f32.gmra.mxu0 %v292
    %v1314 = vpop.f32.mrf.mxu0
    %v1315 = vadd.f32 0.0, %v1314
    %1316 = vmatmul.f32.gmra.mxu0 %v295
    %v1317 = vpop.f32.mrf.mxu0
    %v1318 = vadd.f32 0.0, %v1317
    %1319 = vmatmul.f32.gmra.mxu0 %v298
    %v1320 = vpop.f32.mrf.mxu0
    %v1321 = vadd.f32 0.0, %v1320
    %1322 = vmatmul.f32.gmra.mxu0 %v301
    %v1323 = vpop.f32.mrf.mxu0
    %v1324 = vadd.f32 0.0, %v1323
    %1325 = vmatmul.f32.gmra.mxu0 %v304
    %v1326 = vpop.f32.mrf.mxu0
    %v1327 = vadd.f32 0.0, %v1326
    %1328 = vmatmul.f32.gmra.mxu0 %v307
    %v1329 = vpop.f32.mrf.mxu0
    %v1330 = vadd.f32 0.0, %v1329
    %1331 = vmatmul.f32.gmra.mxu0 %v310
    %v1332 = vpop.f32.mrf.mxu0
    %v1333 = vadd.f32 0.0, %v1332
    %1334 = vmatmul.f32.gmra.mxu0 %v313
    %v1335 = vpop.f32.mrf.mxu0
    %v1336 = vadd.f32 0.0, %v1335
    %1337 = vmatmul.f32.gmra.mxu0 %v316
    %v1338 = vpop.f32.mrf.mxu0
    %v1339 = vadd.f32 0.0, %v1338
    %1340 = vmatmul.f32.gmra.mxu0 %v319
    %v1341 = vpop.f32.mrf.mxu0
    %v1342 = vadd.f32 0.0, %v1341
    %1343 = vmatmul.f32.gmra.mxu0 %v322
    %v1344 = vpop.f32.mrf.mxu0
    %v1345 = vadd.f32 0.0, %v1344
    %1346 = vmatmul.f32.gmra.mxu0 %v325
    %v1347 = vpop.f32.mrf.mxu0
    %v1348 = vadd.f32 0.0, %v1347
    %1349 = vmatmul.f32.gmra.mxu0 %v328
    %v1350 = vpop.f32.mrf.mxu0
    %v1351 = vadd.f32 0.0, %v1350
    %1352 = vmatmul.f32.gmra.mxu0 %v331
    %v1353 = vpop.f32.mrf.mxu0
    %v1354 = vadd.f32 0.0, %v1353
    %1355 = vdwg.mxu0
    %s1356 = scalar_lea.vmem [#allocation3], 16
    %v1357 = vld [vmem:[%s1356] sm:$0xff]
    %v1358 = vld [vmem:[%s1356 + $0x8] sm:$0xff]
    %1359 = vadd.xlane.f32.xlu0 %v1357
    %v1360 = vpop.xlane.xlu0 %1359
    %1361 = vadd.xlane.f32.xlu0 %v1358
    %v1362 = vpop.xlane.xlu0 %1361
    %v1363 = vmul.f32 %v1360, 0.0078125
    %v1364 = vmul.f32 %v1362, 0.0078125
    %v1365 = vmul.f32 %v1357, %v1357
    %v1366 = vmul.f32 %v1358, %v1358
    %1367 = vadd.xlane.f32.xlu0 %v1365
    %v1368 = vpop.xlane.xlu0 %1367
    %1369 = vadd.xlane.f32.xlu0 %v1366
    %v1370 = vpop.xlane.xlu0 %1369
    %v1371 = vmul.f32 %v1368, 0.0078125
    %v1372 = vmul.f32 %v1370, 0.0078125
    %v1373 = vmul.f32 %v1363, %v1363
    %v1374 = vmul.f32 %v1364, %v1364
    %v1375 = vsub.f32 %v1371, %v1373
    %v1376 = vsub.f32 %v1372, %v1374
    %v1377 = vsub.f32 %v1357, %v1363
    %v1378 = vsub.f32 %v1358, %v1364
    %v1379 = vadd.f32 %v1375, 1e-05
    %v1380 = vadd.f32 %v1376, 1e-05
    %v1381 = vrsqrt.pop %v1379
    %v1382 = vmul.f32 %v1381, %v1379
    %v1383 = vmul.f32 %v1382, %v1381
    %v1384 = vmul.f32 0.5, %v1383
    %v1385 = vsub.f32 1.5, %v1384
    %v1386 = vmul.f32 %v1381, %v1385
    %vm1387 = vweird.f32 %v1379
    %vm1388 = vweird.f32 %v1381
    %vm1389 = vmor %vm1387, %vm1388
    %v1390 = vsel %vm1389, %v1381, %v1386
    %v1391 = vrsqrt.pop %v1380
    %v1392 = vmul.f32 %v1391, %v1380
    %v1393 = vmul.f32 %v1392, %v1391
    %v1394 = vmul.f32 0.5, %v1393
    %v1395 = vsub.f32 1.5, %v1394
    %v1396 = vmul.f32 %v1391, %v1395
    %vm1397 = vweird.f32 %v1380
    %vm1398 = vweird.f32 %v1391
    %vm1399 = vmor %vm1397, %vm1398
    %v1400 = vsel %vm1399, %v1391, %v1396
    %v1401 = vmul.f32 %v1377, %v1390
    %v1402 = vmul.f32 %v1378, %v1400
    %v1403 = vmul.f32 %v1401, %v445
    %v1404 = vmul.f32 %v1402, %v445
    %v1405 = vadd.f32 %v1403, %v450
    %v1406 = vadd.f32 %v1404, %v450
    %1407 = vmatpush.xpose.msra.mxu0 0.0
    %1408 = vmatpush.xpose.msra.mxu0 0.0
    %1409 = vmatpush.xpose.msra.mxu0 0.0
    %1410 = vmatpush.xpose.msra.mxu0 0.0
    %1411 = vmatpush.xpose.msra.mxu0 0.0
    %1412 = vmatpush.xpose.msra.mxu0 0.0
    %1413 = vmatpush.xpose.msra.mxu0 0.0
    %1414 = vmatpush.xpose.msra.mxu0 0.0
    %1415 = vmatpush.xpose.msra.mxu0 0.0
    %1416 = vmatpush.xpose.msra.mxu0 0.0
    %1417 = vmatpush.xpose.msra.mxu0 0.0
    %1418 = vmatpush.xpose.msra.mxu0 0.0
    %1419 = vmatpush.xpose.msra.mxu0 0.0
    %1420 = vmatpush.xpose.msra.mxu0 0.0
    %1421 = vmatpush.xpose.msra.mxu0 %v1406
    %1422 = vmatpush.xpose.msra.mxu0 %v1405
    %1423 = vmatmul.f32.gmra.mxu0 %v124
    %v1424 = vpop.f32.mrf.mxu0
    %v1425 = vadd.f32 0.0, %v1424
    %1426 = vmatmul.f32.gmra.mxu0 %v125
    %v1427 = vpop.f32.mrf.mxu0
    %v1428 = vadd.f32 0.0, %v1427
    %1429 = vmatmul.f32.gmra.mxu0 %v126
    %v1430 = vpop.f32.mrf.mxu0
    %v1431 = vadd.f32 0.0, %v1430
    %1432 = vmatmul.f32.gmra.mxu0 %v127
    %v1433 = vpop.f32.mrf.mxu0
    %v1434 = vadd.f32 0.0, %v1433
    %1435 = vmatmul.f32.gmra.mxu0 %v128
    %v1436 = vpop.f32.mrf.mxu0
    %v1437 = vadd.f32 0.0, %v1436
    %1438 = vmatmul.f32.gmra.mxu0 %v129
    %v1439 = vpop.f32.mrf.mxu0
    %v1440 = vadd.f32 0.0, %v1439
    %1441 = vmatmul.f32.gmra.mxu0 %v130
    %v1442 = vpop.f32.mrf.mxu0
    %v1443 = vadd.f32 0.0, %v1442
    %1444 = vmatmul.f32.gmra.mxu0 %v131
    %v1445 = vpop.f32.mrf.mxu0
    %v1446 = vadd.f32 0.0, %v1445
    %1447 = vmatmul.f32.gmra.mxu0 %v132
    %v1448 = vpop.f32.mrf.mxu0
    %v1449 = vadd.f32 0.0, %v1448
    %1450 = vmatmul.f32.gmra.mxu0 %v133
    %v1451 = vpop.f32.mrf.mxu0
    %v1452 = vadd.f32 0.0, %v1451
    %1453 = vmatmul.f32.gmra.mxu0 %v134
    %v1454 = vpop.f32.mrf.mxu0
    %v1455 = vadd.f32 0.0, %v1454
    %1456 = vmatmul.f32.gmra.mxu0 %v135
    %v1457 = vpop.f32.mrf.mxu0
    %v1458 = vadd.f32 0.0, %v1457
    %1459 = vmatmul.f32.gmra.mxu0 %v136
    %v1460 = vpop.f32.mrf.mxu0
    %v1461 = vadd.f32 0.0, %v1460
    %1462 = vmatmul.f32.gmra.mxu0 %v137
    %v1463 = vpop.f32.mrf.mxu0
    %v1464 = vadd.f32 0.0, %v1463
    %1465 = vmatmul.f32.gmra.mxu0 %v138
    %v1466 = vpop.f32.mrf.mxu0
    %v1467 = vadd.f32 0.0, %v1466
    %1468 = vmatmul.f32.gmra.mxu0 %v139
    %v1469 = vpop.f32.mrf.mxu0
    %v1470 = vadd.f32 0.0, %v1469
    %1471 = vdwg.mxu0
    %1472 = vmatpush.xpose.msra.mxu0 0.0
    %1473 = vmatpush.xpose.msra.mxu0 0.0
    %1474 = vmatpush.xpose.msra.mxu0 0.0
    %1475 = vmatpush.xpose.msra.mxu0 0.0
    %1476 = vmatpush.xpose.msra.mxu0 0.0
    %1477 = vmatpush.xpose.msra.mxu0 0.0
    %1478 = vmatpush.xpose.msra.mxu0 0.0
    %1479 = vmatpush.xpose.msra.mxu0 0.0
    %1480 = vmatpush.xpose.msra.mxu0 0.0
    %1481 = vmatpush.xpose.msra.mxu0 0.0
    %1482 = vmatpush.xpose.msra.mxu0 0.0
    %1483 = vmatpush.xpose.msra.mxu0 0.0
    %1484 = vmatpush.xpose.msra.mxu0 0.0
    %1485 = vmatpush.xpose.msra.mxu0 0.0
    %1486 = vmatpush.xpose.msra.mxu0 %v1406
    %1487 = vmatpush.xpose.msra.mxu0 %v1405
    %1488 = vmatmul.f32.gmra.mxu0 %v140
    %v1489 = vpop.f32.mrf.mxu0
    %v1490 = vadd.f32 0.0, %v1489
    %1491 = vmatmul.f32.gmra.mxu0 %v141
    %v1492 = vpop.f32.mrf.mxu0
    %v1493 = vadd.f32 0.0, %v1492
    %1494 = vmatmul.f32.gmra.mxu0 %v142
    %v1495 = vpop.f32.mrf.mxu0
    %v1496 = vadd.f32 0.0, %v1495
    %1497 = vmatmul.f32.gmra.mxu0 %v143
    %v1498 = vpop.f32.mrf.mxu0
    %v1499 = vadd.f32 0.0, %v1498
    %1500 = vmatmul.f32.gmra.mxu0 %v144
    %v1501 = vpop.f32.mrf.mxu0
    %v1502 = vadd.f32 0.0, %v1501
    %1503 = vmatmul.f32.gmra.mxu0 %v145
    %v1504 = vpop.f32.mrf.mxu0
    %v1505 = vadd.f32 0.0, %v1504
    %1506 = vmatmul.f32.gmra.mxu0 %v146
    %v1507 = vpop.f32.mrf.mxu0
    %v1508 = vadd.f32 0.0, %v1507
    %1509 = vmatmul.f32.gmra.mxu0 %v147
    %v1510 = vpop.f32.mrf.mxu0
    %v1511 = vadd.f32 0.0, %v1510
    %1512 = vmatmul.f32.gmra.mxu0 %v148
    %v1513 = vpop.f32.mrf.mxu0
    %v1514 = vadd.f32 0.0, %v1513
    %1515 = vmatmul.f32.gmra.mxu0 %v149
    %v1516 = vpop.f32.mrf.mxu0
    %v1517 = vadd.f32 0.0, %v1516
    %1518 = vmatmul.f32.gmra.mxu0 %v150
    %v1519 = vpop.f32.mrf.mxu0
    %v1520 = vadd.f32 0.0, %v1519
    %1521 = vmatmul.f32.gmra.mxu0 %v151
    %v1522 = vpop.f32.mrf.mxu0
    %v1523 = vadd.f32 0.0, %v1522
    %1524 = vmatmul.f32.gmra.mxu0 %v152
    %v1525 = vpop.f32.mrf.mxu0
    %v1526 = vadd.f32 0.0, %v1525
    %1527 = vmatmul.f32.gmra.mxu0 %v153
    %v1528 = vpop.f32.mrf.mxu0
    %v1529 = vadd.f32 0.0, %v1528
    %1530 = vmatmul.f32.gmra.mxu0 %v154
    %v1531 = vpop.f32.mrf.mxu0
    %v1532 = vadd.f32 0.0, %v1531
    %1533 = vmatmul.f32.gmra.mxu0 %v155
    %v1534 = vpop.f32.mrf.mxu0
    %v1535 = vadd.f32 0.0, %v1534
    %1536 = vdwg.mxu0
    %s1537 = scalar_lea.vmem %s3, 16
    %v1538 = vld [vmem:[%s1537] sm:$0xff]
    %v1539 = vld [vmem:[%s1537 + $0x8] sm:$0xff]
    %1541 = vset.pattern.permute.xlu0 0
    %1542 = vperm.xlu0 %1541, %v1538
    %v1543 = vpop.permute.xlu0 %1542
    %1546 = vset.pattern.permute.xlu0 0
    %1547 = vperm.xlu0 %1546, %v1539
    %v1548 = vpop.permute.xlu0 %1547
    %1550 = vxpose.xlu0.b32.start [1/16] %v1425, 128
    %1551 = vxpose.xlu0.b32.cont [2/16] %v1428, 128
    %1552 = vxpose.xlu0.b32.cont [3/16] %v1431, 128
    %1553 = vxpose.xlu0.b32.cont [4/16] %v1434, 128
    %1554 = vxpose.xlu0.b32.cont [5/16] 0.0, 128
    %1555 = vxpose.xlu0.b32.cont [6/16] 0.0, 128
    %1556 = vxpose.xlu0.b32.cont [7/16] 0.0, 128
    %1557 = vxpose.xlu0.b32.cont [8/16] 0.0, 128
    %1558 = vxpose.xlu0.b32.cont [9/16] 0.0, 128
    %1559 = vxpose.xlu0.b32.cont [10/16] 0.0, 128
    %1560 = vxpose.xlu0.b32.cont [11/16] 0.0, 128
    %1561 = vxpose.xlu0.b32.cont [12/16] 0.0, 128
    %1562 = vxpose.xlu0.b32.cont [13/16] 0.0, 128
    %1563 = vxpose.xlu0.b32.cont [14/16] 0.0, 128
    %1564 = vxpose.xlu0.b32.cont [15/16] 0.0, 128
    %1565 = vxpose.xlu0.b32.end [16/16] 0.0, 128
    %v1566 = vpop.trf.xlu0
    %v1567 = vpop.trf.xlu0
    %v1568 = vpop.trf.xlu0
    %v1569 = vpop.trf.xlu0
    %v1570 = vpop.trf.xlu0
    %v1571 = vpop.trf.xlu0
    %v1572 = vpop.trf.xlu0
    %v1573 = vpop.trf.xlu0
    %v1574 = vpop.trf.xlu0
    %v1575 = vpop.trf.xlu0
    %v1576 = vpop.trf.xlu0
    %v1577 = vpop.trf.xlu0
    %v1578 = vpop.trf.xlu0
    %v1579 = vpop.trf.xlu0
    %v1580 = vpop.trf.xlu0
    %v1581 = vpop.trf.xlu0
    %v1583 = vsel %vm284, %v1566, 0
    %v1586 = vsel %vm284, %v1567, 0
    %1588 = vmatpush.msra.mxu0 0.0
    %1589 = vmatpush.msra.mxu0 0.0
    %1590 = vmatpush.msra.mxu0 0.0
    %1591 = vmatpush.msra.mxu0 0.0
    %1592 = vmatpush.msra.mxu0 0.0
    %1593 = vmatpush.msra.mxu0 0.0
    %1594 = vmatpush.msra.mxu0 0.0
    %1595 = vmatpush.msra.mxu0 0.0
    %1596 = vmatpush.msra.mxu0 0.0
    %1597 = vmatpush.msra.mxu0 0.0
    %1598 = vmatpush.msra.mxu0 0.0
    %1599 = vmatpush.msra.mxu0 0.0
    %1600 = vmatpush.msra.mxu0 %v1318
    %1601 = vmatpush.msra.mxu0 %v1315
    %1602 = vmatpush.msra.mxu0 %v1312
    %1603 = vmatpush.msra.mxu0 %v1309
    %1604 = vmatmul.f32.gmra.mxu0 %v1583
    %v1605 = vpop.f32.mrf.mxu0
    %v1606 = vadd.f32 %v1543, %v1605
    %1607 = vmatmul.f32.gmra.mxu0 %v1586
    %v1608 = vpop.f32.mrf.mxu0
    %v1609 = vadd.f32 %v1548, %v1608
    %1610 = vdwg.mxu0
    %v1611 = vsel %vm164, %v1606, -inf
    %v1612 = vsel %vm164, %v1609, -inf
    %v1613 = vmax.f32 %v1611, %v1612
    %v1614 = vrot.slane %v1613, 4
    %v1615 = vmax.f32 %v1613, %v1614
    %v1616 = vrot.slane %v1615, 2
    %v1617 = vmax.f32 %v1615, %v1616
    %v1618 = vrot.slane %v1617, 1
    %v1619 = vmax.f32 %v1617, %v1618
    %v1620 = vsub.f32 %v1606, %v1619
    %v1621 = vsub.f32 %v1609, %v1619
    %v1622 = vmul.f32 %v1620, 1.442695
    %v1623 = vpow.pop %v1622
    %v1624 = vmul.f32 %v1621, 1.442695
    %v1625 = vpow.pop %v1624
    %v1626 = vsel %vm164, %v1623, 0.0
    %v1627 = vsel %vm164, %v1625, 0.0
    %v1628 = vadd.f32 %v1626, %v1627
    %v1629 = vrot.slane %v1628, 4
    %v1630 = vadd.f32 %v1628, %v1629
    %v1631 = vrot.slane %v1630, 2
    %v1632 = vadd.f32 %v1630, %v1631
    %v1633 = vrot.slane %v1632, 1
    %v1634 = vadd.f32 %v1632, %v1633
    %v1635 = vrcp.pop %v1634
    %v1636 = vmul.f32 %v1634, %v1635
    %v1637 = vsub.f32 1.0, %v1636
    %v1638 = vmul.f32 %v1635, %v1637
    %v1639 = vadd.f32 %v1635, %v1638
    %vm1640 = vweird.f32 %v1634
    %vm1641 = vweird.f32 %v1635
    %vm1642 = vmor %vm1640, %vm1641
    %v1643 = vsel %vm1642, %v1635, %v1639
    %v1644 = vand.u32 2147483647, %v1634
    %vm1645 = vcmp.eq.f32.partialorder %v1644, 8.507059e+37
    %v1646 = vand.u32 %v1634, 2147483648
    %v1647 = vor.u32 1.1754944e-38, %v1646
    %v1648 = vsel %vm1645, %v1647, %v1643
    %v1649 = vmul.f32 %v1623, %v1648
    %v1650 = vmul.f32 %v1625, %v1648
    %v1652 = vsel %vm697, %v1490, 0
    %v1655 = vsel %vm697, %v1493, 0
    %v1658 = vsel %vm697, %v1496, 0
    %v1661 = vsel %vm697, %v1499, 0
    %1663 = vmatpush.msra.mxu0 0.0
    %1664 = vmatpush.msra.mxu0 0.0
    %1665 = vmatpush.msra.mxu0 0.0
    %1666 = vmatpush.msra.mxu0 0.0
    %1667 = vmatpush.msra.mxu0 0.0
    %1668 = vmatpush.msra.mxu0 0.0
    %1669 = vmatpush.msra.mxu0 0.0
    %1670 = vmatpush.msra.mxu0 0.0
    %1671 = vmatpush.msra.mxu0 0.0
    %1672 = vmatpush.msra.mxu0 0.0
    %1673 = vmatpush.msra.mxu0 0.0
    %1674 = vmatpush.msra.mxu0 0.0
    %1675 = vmatpush.msra.mxu0 0.0
    %1676 = vmatpush.msra.mxu0 0.0
    %1677 = vmatpush.msra.mxu0 %v1650
    %1678 = vmatpush.msra.mxu0 %v1649
    %1679 = vmatmul.f32.gmra.mxu0 %v1652
    %v1680 = vpop.f32.mrf.mxu0
    %v1681 = vadd.f32 0.0, %v1680
    %1682 = vmatmul.f32.gmra.mxu0 %v1655
    %v1683 = vpop.f32.mrf.mxu0
    %v1684 = vadd.f32 0.0, %v1683
    %1685 = vmatmul.f32.gmra.mxu0 %v1658
    %v1686 = vpop.f32.mrf.mxu0
    %v1687 = vadd.f32 0.0, %v1686
    %1688 = vmatmul.f32.gmra.mxu0 %v1661
    %v1689 = vpop.f32.mrf.mxu0
    %v1690 = vadd.f32 0.0, %v1689
    %1691 = vdwg.mxu0
    %1692 = vxpose.xlu0.b32.start [1/16] %v1437, 128
    %1693 = vxpose.xlu0.b32.cont [2/16] %v1440, 128
    %1694 = vxpose.xlu0.b32.cont [3/16] %v1443, 128
    %1695 = vxpose.xlu0.b32.cont [4/16] %v1446, 128
    %1696 = vxpose.xlu0.b32.cont [5/16] 0.0, 128
    %1697 = vxpose.xlu0.b32.cont [6/16] 0.0, 128
    %1698 = vxpose.xlu0.b32.cont [7/16] 0.0, 128
    %1699 = vxpose.xlu0.b32.cont [8/16] 0.0, 128
    %1700 = vxpose.xlu0.b32.cont [9/16] 0.0, 128
    %1701 = vxpose.xlu0.b32.cont [10/16] 0.0, 128
    %1702 = vxpose.xlu0.b32.cont [11/16] 0.0, 128
    %1703 = vxpose.xlu0.b32.cont [12/16] 0.0, 128
    %1704 = vxpose.xlu0.b32.cont [13/16] 0.0, 128
    %1705 = vxpose.xlu0.b32.cont [14/16] 0.0, 128
    %1706 = vxpose.xlu0.b32.cont [15/16] 0.0, 128
    %1707 = vxpose.xlu0.b32.end [16/16] 0.0, 128
    %v1708 = vpop.trf.xlu0
    %v1709 = vpop.trf.xlu0
    %v1710 = vpop.trf.xlu0
    %v1711 = vpop.trf.xlu0
    %v1712 = vpop.trf.xlu0
    %v1713 = vpop.trf.xlu0
    %v1714 = vpop.trf.xlu0
    %v1715 = vpop.trf.xlu0
    %v1716 = vpop.trf.xlu0
    %v1717 = vpop.trf.xlu0
    %v1718 = vpop.trf.xlu0
    %v1719 = vpop.trf.xlu0
    %v1720 = vpop.trf.xlu0
    %v1721 = vpop.trf.xlu0
    %v1722 = vpop.trf.xlu0
    %v1723 = vpop.trf.xlu0
    %v1725 = vsel %vm284, %v1708, 0
    %v1728 = vsel %vm284, %v1709, 0
    %1730 = vmatpush.msra.mxu0 0.0
    %1731 = vmatpush.msra.mxu0 0.0
    %1732 = vmatpush.msra.mxu0 0.0
    %1733 = vmatpush.msra.mxu0 0.0
    %1734 = vmatpush.msra.mxu0 0.0
    %1735 = vmatpush.msra.mxu0 0.0
    %1736 = vmatpush.msra.mxu0 0.0
    %1737 = vmatpush.msra.mxu0 0.0
    %1738 = vmatpush.msra.mxu0 0.0
    %1739 = vmatpush.msra.mxu0 0.0
    %1740 = vmatpush.msra.mxu0 0.0
    %1741 = vmatpush.msra.mxu0 0.0
    %1742 = vmatpush.msra.mxu0 %v1330
    %1743 = vmatpush.msra.mxu0 %v1327
    %1744 = vmatpush.msra.mxu0 %v1324
    %1745 = vmatpush.msra.mxu0 %v1321
    %1746 = vmatmul.f32.gmra.mxu0 %v1725
    %v1747 = vpop.f32.mrf.mxu0
    %v1748 = vadd.f32 %v1543, %v1747
    %1749 = vmatmul.f32.gmra.mxu0 %v1728
    %v1750 = vpop.f32.mrf.mxu0
    %v1751 = vadd.f32 %v1548, %v1750
    %1752 = vdwg.mxu0
    %v1753 = vsel %vm164, %v1748, -inf
    %v1754 = vsel %vm164, %v1751, -inf
    %v1755 = vmax.f32 %v1753, %v1754
    %v1756 = vrot.slane %v1755, 4
    %v1757 = vmax.f32 %v1755, %v1756
    %v1758 = vrot.slane %v1757, 2
    %v1759 = vmax.f32 %v1757, %v1758
    %v1760 = vrot.slane %v1759, 1
    %v1761 = vmax.f32 %v1759, %v1760
    %v1762 = vsub.f32 %v1748, %v1761
    %v1763 = vsub.f32 %v1751, %v1761
    %v1764 = vmul.f32 %v1762, 1.442695
    %v1765 = vpow.pop %v1764
    %v1766 = vmul.f32 %v1763, 1.442695
    %v1767 = vpow.pop %v1766
    %v1768 = vsel %vm164, %v1765, 0.0
    %v1769 = vsel %vm164, %v1767, 0.0
    %v1770 = vadd.f32 %v1768, %v1769
    %v1771 = vrot.slane %v1770, 4
    %v1772 = vadd.f32 %v1770, %v1771
    %v1773 = vrot.slane %v1772, 2
    %v1774 = vadd.f32 %v1772, %v1773
    %v1775 = vrot.slane %v1774, 1
    %v1776 = vadd.f32 %v1774, %v1775
    %v1777 = vrcp.pop %v1776
    %v1778 = vmul.f32 %v1776, %v1777
    %v1779 = vsub.f32 1.0, %v1778
    %v1780 = vmul.f32 %v1777, %v1779
    %v1781 = vadd.f32 %v1777, %v1780
    %vm1782 = vweird.f32 %v1776
    %vm1783 = vweird.f32 %v1777
    %vm1784 = vmor %vm1782, %vm1783
    %v1785 = vsel %vm1784, %v1777, %v1781
    %v1786 = vand.u32 2147483647, %v1776
    %vm1787 = vcmp.eq.f32.partialorder %v1786, 8.507059e+37
    %v1788 = vand.u32 %v1776, 2147483648
    %v1789 = vor.u32 1.1754944e-38, %v1788
    %v1790 = vsel %vm1787, %v1789, %v1785
    %v1791 = vmul.f32 %v1765, %v1790
    %v1792 = vmul.f32 %v1767, %v1790
    %v1794 = vsel %vm697, %v1502, 0
    %v1797 = vsel %vm697, %v1505, 0
    %v1800 = vsel %vm697, %v1508, 0
    %v1803 = vsel %vm697, %v1511, 0
    %1805 = vmatpush.msra.mxu0 0.0
    %1806 = vmatpush.msra.mxu0 0.0
    %1807 = vmatpush.msra.mxu0 0.0
    %1808 = vmatpush.msra.mxu0 0.0
    %1809 = vmatpush.msra.mxu0 0.0
    %1810 = vmatpush.msra.mxu0 0.0
    %1811 = vmatpush.msra.mxu0 0.0
    %1812 = vmatpush.msra.mxu0 0.0
    %1813 = vmatpush.msra.mxu0 0.0
    %1814 = vmatpush.msra.mxu0 0.0
    %1815 = vmatpush.msra.mxu0 0.0
    %1816 = vmatpush.msra.mxu0 0.0
    %1817 = vmatpush.msra.mxu0 0.0
    %1818 = vmatpush.msra.mxu0 0.0
    %1819 = vmatpush.msra.mxu0 %v1792
    %1820 = vmatpush.msra.mxu0 %v1791
    %1821 = vmatmul.f32.gmra.mxu0 %v1794
    %v1822 = vpop.f32.mrf.mxu0
    %v1823 = vadd.f32 0.0, %v1822
    %1824 = vmatmul.f32.gmra.mxu0 %v1797
    %v1825 = vpop.f32.mrf.mxu0
    %v1826 = vadd.f32 0.0, %v1825
    %1827 = vmatmul.f32.gmra.mxu0 %v1800
    %v1828 = vpop.f32.mrf.mxu0
    %v1829 = vadd.f32 0.0, %v1828
    %1830 = vmatmul.f32.gmra.mxu0 %v1803
    %v1831 = vpop.f32.mrf.mxu0
    %v1832 = vadd.f32 0.0, %v1831
    %1833 = vdwg.mxu0
    %1834 = vxpose.xlu0.b32.start [1/16] %v1449, 128
    %1835 = vxpose.xlu0.b32.cont [2/16] %v1452, 128
    %1836 = vxpose.xlu0.b32.cont [3/16] %v1455, 128
    %1837 = vxpose.xlu0.b32.cont [4/16] %v1458, 128
    %1838 = vxpose.xlu0.b32.cont [5/16] 0.0, 128
    %1839 = vxpose.xlu0.b32.cont [6/16] 0.0, 128
    %1840 = vxpose.xlu0.b32.cont [7/16] 0.0, 128
    %1841 = vxpose.xlu0.b32.cont [8/16] 0.0, 128
    %1842 = vxpose.xlu0.b32.cont [9/16] 0.0, 128
    %1843 = vxpose.xlu0.b32.cont [10/16] 0.0, 128
    %1844 = vxpose.xlu0.b32.cont [11/16] 0.0, 128
    %1845 = vxpose.xlu0.b32.cont [12/16] 0.0, 128
    %1846 = vxpose.xlu0.b32.cont [13/16] 0.0, 128
    %1847 = vxpose.xlu0.b32.cont [14/16] 0.0, 128
    %1848 = vxpose.xlu0.b32.cont [15/16] 0.0, 128
    %1849 = vxpose.xlu0.b32.end [16/16] 0.0, 128
    %v1850 = vpop.trf.xlu0
    %v1851 = vpop.trf.xlu0
    %v1852 = vpop.trf.xlu0
    %v1853 = vpop.trf.xlu0
    %v1854 = vpop.trf.xlu0
    %v1855 = vpop.trf.xlu0
    %v1856 = vpop.trf.xlu0
    %v1857 = vpop.trf.xlu0
    %v1858 = vpop.trf.xlu0
    %v1859 = vpop.trf.xlu0
    %v1860 = vpop.trf.xlu0
    %v1861 = vpop.trf.xlu0
    %v1862 = vpop.trf.xlu0
    %v1863 = vpop.trf.xlu0
    %v1864 = vpop.trf.xlu0
    %v1865 = vpop.trf.xlu0
    %v1867 = vsel %vm284, %v1850, 0
    %v1870 = vsel %vm284, %v1851, 0
    %1872 = vmatpush.msra.mxu0 0.0
    %1873 = vmatpush.msra.mxu0 0.0
    %1874 = vmatpush.msra.mxu0 0.0
    %1875 = vmatpush.msra.mxu0 0.0
    %1876 = vmatpush.msra.mxu0 0.0
    %1877 = vmatpush.msra.mxu0 0.0
    %1878 = vmatpush.msra.mxu0 0.0
    %1879 = vmatpush.msra.mxu0 0.0
    %1880 = vmatpush.msra.mxu0 0.0
    %1881 = vmatpush.msra.mxu0 0.0
    %1882 = vmatpush.msra.mxu0 0.0
    %1883 = vmatpush.msra.mxu0 0.0
    %1884 = vmatpush.msra.mxu0 %v1342
    %1885 = vmatpush.msra.mxu0 %v1339
    %1886 = vmatpush.msra.mxu0 %v1336
    %1887 = vmatpush.msra.mxu0 %v1333
    %1888 = vmatmul.f32.gmra.mxu0 %v1867
    %v1889 = vpop.f32.mrf.mxu0
    %v1890 = vadd.f32 %v1543, %v1889
    %1891 = vmatmul.f32.gmra.mxu0 %v1870
    %v1892 = vpop.f32.mrf.mxu0
    %v1893 = vadd.f32 %v1548, %v1892
    %1894 = vdwg.mxu0
    %v1895 = vsel %vm164, %v1890, -inf
    %v1896 = vsel %vm164, %v1893, -inf
    %v1897 = vmax.f32 %v1895, %v1896
    %v1898 = vrot.slane %v1897, 4
    %v1899 = vmax.f32 %v1897, %v1898
    %v1900 = vrot.slane %v1899, 2
    %v1901 = vmax.f32 %v1899, %v1900
    %v1902 = vrot.slane %v1901, 1
    %v1903 = vmax.f32 %v1901, %v1902
    %v1904 = vsub.f32 %v1890, %v1903
    %v1905 = vsub.f32 %v1893, %v1903
    %v1906 = vmul.f32 %v1904, 1.442695
    %v1907 = vpow.pop %v1906
    %v1908 = vmul.f32 %v1905, 1.442695
    %v1909 = vpow.pop %v1908
    %v1910 = vsel %vm164, %v1907, 0.0
    %v1911 = vsel %vm164, %v1909, 0.0
    %v1912 = vadd.f32 %v1910, %v1911
    %v1913 = vrot.slane %v1912, 4
    %v1914 = vadd.f32 %v1912, %v1913
    %v1915 = vrot.slane %v1914, 2
    %v1916 = vadd.f32 %v1914, %v1915
    %v1917 = vrot.slane %v1916, 1
    %v1918 = vadd.f32 %v1916, %v1917
    %v1919 = vrcp.pop %v1918
    %v1920 = vmul.f32 %v1918, %v1919
    %v1921 = vsub.f32 1.0, %v1920
    %v1922 = vmul.f32 %v1919, %v1921
    %v1923 = vadd.f32 %v1919, %v1922
    %vm1924 = vweird.f32 %v1918
    %vm1925 = vweird.f32 %v1919
    %vm1926 = vmor %vm1924, %vm1925
    %v1927 = vsel %vm1926, %v1919, %v1923
    %v1928 = vand.u32 2147483647, %v1918
    %vm1929 = vcmp.eq.f32.partialorder %v1928, 8.507059e+37
    %v1930 = vand.u32 %v1918, 2147483648
    %v1931 = vor.u32 1.1754944e-38, %v1930
    %v1932 = vsel %vm1929, %v1931, %v1927
    %v1933 = vmul.f32 %v1907, %v1932
    %v1934 = vmul.f32 %v1909, %v1932
    %v1936 = vsel %vm697, %v1514, 0
    %v1939 = vsel %vm697, %v1517, 0
    %v1942 = vsel %vm697, %v1520, 0
    %v1945 = vsel %vm697, %v1523, 0
    %1947 = vmatpush.msra.mxu0 0.0
    %1948 = vmatpush.msra.mxu0 0.0
    %1949 = vmatpush.msra.mxu0 0.0
    %1950 = vmatpush.msra.mxu0 0.0
    %1951 = vmatpush.msra.mxu0 0.0
    %1952 = vmatpush.msra.mxu0 0.0
    %1953 = vmatpush.msra.mxu0 0.0
    %1954 = vmatpush.msra.mxu0 0.0
    %1955 = vmatpush.msra.mxu0 0.0
    %1956 = vmatpush.msra.mxu0 0.0
    %1957 = vmatpush.msra.mxu0 0.0
    %1958 = vmatpush.msra.mxu0 0.0
    %1959 = vmatpush.msra.mxu0 0.0
    %1960 = vmatpush.msra.mxu0 0.0
    %1961 = vmatpush.msra.mxu0 %v1934
    %1962 = vmatpush.msra.mxu0 %v1933
    %1963 = vmatmul.f32.gmra.mxu0 %v1936
    %v1964 = vpop.f32.mrf.mxu0
    %v1965 = vadd.f32 0.0, %v1964
    %1966 = vmatmul.f32.gmra.mxu0 %v1939
    %v1967 = vpop.f32.mrf.mxu0
    %v1968 = vadd.f32 0.0, %v1967
    %1969 = vmatmul.f32.gmra.mxu0 %v1942
    %v1970 = vpop.f32.mrf.mxu0
    %v1971 = vadd.f32 0.0, %v1970
    %1972 = vmatmul.f32.gmra.mxu0 %v1945
    %v1973 = vpop.f32.mrf.mxu0
    %v1974 = vadd.f32 0.0, %v1973
    %1975 = vdwg.mxu0
    %1976 = vxpose.xlu0.b32.start [1/16] %v1461, 128
    %1977 = vxpose.xlu0.b32.cont [2/16] %v1464, 128
    %1978 = vxpose.xlu0.b32.cont [3/16] %v1467, 128
    %1979 = vxpose.xlu0.b32.cont [4/16] %v1470, 128
    %1980 = vxpose.xlu0.b32.cont [5/16] 0.0, 128
    %1981 = vxpose.xlu0.b32.cont [6/16] 0.0, 128
    %1982 = vxpose.xlu0.b32.cont [7/16] 0.0, 128
    %1983 = vxpose.xlu0.b32.cont [8/16] 0.0, 128
    %1984 = vxpose.xlu0.b32.cont [9/16] 0.0, 128
    %1985 = vxpose.xlu0.b32.cont [10/16] 0.0, 128
    %1986 = vxpose.xlu0.b32.cont [11/16] 0.0, 128
    %1987 = vxpose.xlu0.b32.cont [12/16] 0.0, 128
    %1988 = vxpose.xlu0.b32.cont [13/16] 0.0, 128
    %1989 = vxpose.xlu0.b32.cont [14/16] 0.0, 128
    %1990 = vxpose.xlu0.b32.cont [15/16] 0.0, 128
    %1991 = vxpose.xlu0.b32.end [16/16] 0.0, 128
    %v1992 = vpop.trf.xlu0
    %v1993 = vpop.trf.xlu0
    %v1994 = vpop.trf.xlu0
    %v1995 = vpop.trf.xlu0
    %v1996 = vpop.trf.xlu0
    %v1997 = vpop.trf.xlu0
    %v1998 = vpop.trf.xlu0
    %v1999 = vpop.trf.xlu0
    %v2000 = vpop.trf.xlu0
    %v2001 = vpop.trf.xlu0
    %v2002 = vpop.trf.xlu0
    %v2003 = vpop.trf.xlu0
    %v2004 = vpop.trf.xlu0
    %v2005 = vpop.trf.xlu0
    %v2006 = vpop.trf.xlu0
    %v2007 = vpop.trf.xlu0
    %v2009 = vsel %vm284, %v1992, 0
    %v2012 = vsel %vm284, %v1993, 0
    %2014 = vmatpush.msra.mxu0 0.0
    %2015 = vmatpush.msra.mxu0 0.0
    %2016 = vmatpush.msra.mxu0 0.0
    %2017 = vmatpush.msra.mxu0 0.0
    %2018 = vmatpush.msra.mxu0 0.0
    %2019 = vmatpush.msra.mxu0 0.0
    %2020 = vmatpush.msra.mxu0 0.0
    %2021 = vmatpush.msra.mxu0 0.0
    %2022 = vmatpush.msra.mxu0 0.0
    %2023 = vmatpush.msra.mxu0 0.0
    %2024 = vmatpush.msra.mxu0 0.0
    %2025 = vmatpush.msra.mxu0 0.0
    %2026 = vmatpush.msra.mxu0 %v1354
    %2027 = vmatpush.msra.mxu0 %v1351
    %2028 = vmatpush.msra.mxu0 %v1348
    %2029 = vmatpush.msra.mxu0 %v1345
    %2030 = vmatmul.f32.gmra.mxu0 %v2009
    %v2031 = vpop.f32.mrf.mxu0
    %v2032 = vadd.f32 %v1543, %v2031
    %2033 = vmatmul.f32.gmra.mxu0 %v2012
    %v2034 = vpop.f32.mrf.mxu0
    %v2035 = vadd.f32 %v1548, %v2034
    %2036 = vdwg.mxu0
    %v2037 = vsel %vm164, %v2032, -inf
    %v2038 = vsel %vm164, %v2035, -inf
    %v2039 = vmax.f32 %v2037, %v2038
    %v2040 = vrot.slane %v2039, 4
    %v2041 = vmax.f32 %v2039, %v2040
    %v2042 = vrot.slane %v2041, 2
    %v2043 = vmax.f32 %v2041, %v2042
    %v2044 = vrot.slane %v2043, 1
    %v2045 = vmax.f32 %v2043, %v2044
    %v2046 = vsub.f32 %v2032, %v2045
    %v2047 = vsub.f32 %v2035, %v2045
    %v2048 = vmul.f32 %v2046, 1.442695
    %v2049 = vpow.pop %v2048
    %v2050 = vmul.f32 %v2047, 1.442695
    %v2051 = vpow.pop %v2050
    %v2052 = vsel %vm164, %v2049, 0.0
    %v2053 = vsel %vm164, %v2051, 0.0
    %v2054 = vadd.f32 %v2052, %v2053
    %v2055 = vrot.slane %v2054, 4
    %v2056 = vadd.f32 %v2054, %v2055
    %v2057 = vrot.slane %v2056, 2
    %v2058 = vadd.f32 %v2056, %v2057
    %v2059 = vrot.slane %v2058, 1
    %v2060 = vadd.f32 %v2058, %v2059
    %v2061 = vrcp.pop %v2060
    %v2062 = vmul.f32 %v2060, %v2061
    %v2063 = vsub.f32 1.0, %v2062
    %v2064 = vmul.f32 %v2061, %v2063
    %v2065 = vadd.f32 %v2061, %v2064
    %vm2066 = vweird.f32 %v2060
    %vm2067 = vweird.f32 %v2061
    %vm2068 = vmor %vm2066, %vm2067
    %v2069 = vsel %vm2068, %v2061, %v2065
    %v2070 = vand.u32 2147483647, %v2060
    %vm2071 = vcmp.eq.f32.partialorder %v2070, 8.507059e+37
    %v2072 = vand.u32 %v2060, 2147483648
    %v2073 = vor.u32 1.1754944e-38, %v2072
    %v2074 = vsel %vm2071, %v2073, %v2069
    %v2075 = vmul.f32 %v2049, %v2074
    %v2076 = vmul.f32 %v2051, %v2074
    %v2078 = vsel %vm697, %v1526, 0
    %v2081 = vsel %vm697, %v1529, 0
    %v2084 = vsel %vm697, %v1532, 0
    %v2087 = vsel %vm697, %v1535, 0
    %2089 = vmatpush.msra.mxu0 0.0
    %2090 = vmatpush.msra.mxu0 0.0
    %2091 = vmatpush.msra.mxu0 0.0
    %2092 = vmatpush.msra.mxu0 0.0
    %2093 = vmatpush.msra.mxu0 0.0
    %2094 = vmatpush.msra.mxu0 0.0
    %2095 = vmatpush.msra.mxu0 0.0
    %2096 = vmatpush.msra.mxu0 0.0
    %2097 = vmatpush.msra.mxu0 0.0
    %2098 = vmatpush.msra.mxu0 0.0
    %2099 = vmatpush.msra.mxu0 0.0
    %2100 = vmatpush.msra.mxu0 0.0
    %2101 = vmatpush.msra.mxu0 0.0
    %2102 = vmatpush.msra.mxu0 0.0
    %2103 = vmatpush.msra.mxu0 %v2076
    %2104 = vmatpush.msra.mxu0 %v2075
    %2105 = vmatmul.f32.gmra.mxu0 %v2078
    %v2106 = vpop.f32.mrf.mxu0
    %v2107 = vadd.f32 0.0, %v2106
    %2108 = vmatmul.f32.gmra.mxu0 %v2081
    %v2109 = vpop.f32.mrf.mxu0
    %v2110 = vadd.f32 0.0, %v2109
    %2111 = vmatmul.f32.gmra.mxu0 %v2084
    %v2112 = vpop.f32.mrf.mxu0
    %v2113 = vadd.f32 0.0, %v2112
    %2114 = vmatmul.f32.gmra.mxu0 %v2087
    %v2115 = vpop.f32.mrf.mxu0
    %v2116 = vadd.f32 0.0, %v2115
    %2117 = vdwg.mxu0
    %2118 = vmatpush.msra.mxu0 %v2116
    %2119 = vmatpush.msra.mxu0 %v2113
    %2120 = vmatpush.msra.mxu0 %v2110
    %2121 = vmatpush.msra.mxu0 %v2107
    %2122 = vmatpush.msra.mxu0 %v1974
    %2123 = vmatpush.msra.mxu0 %v1971
    %2124 = vmatpush.msra.mxu0 %v1968
    %2125 = vmatpush.msra.mxu0 %v1965
    %2126 = vmatpush.msra.mxu0 %v1832
    %2127 = vmatpush.msra.mxu0 %v1829
    %2128 = vmatpush.msra.mxu0 %v1826
    %2129 = vmatpush.msra.mxu0 %v1823
    %2130 = vmatpush.msra.mxu0 %v1690
    %2131 = vmatpush.msra.mxu0 %v1687
    %2132 = vmatpush.msra.mxu0 %v1684
    %2133 = vmatpush.msra.mxu0 %v1681
    %2134 = vmatmul.f32.gmra.mxu0 %v156
    %v2135 = vpop.f32.mrf.mxu0
    %v2136 = vadd.f32 0.0, %v2135
    %2137 = vmatmul.f32.gmra.mxu0 %v157
    %v2138 = vpop.f32.mrf.mxu0
    %v2139 = vadd.f32 0.0, %v2138
    %2140 = vmatmul.f32.gmra.mxu0 %v158
    %v2141 = vpop.f32.mrf.mxu0
    %v2142 = vadd.f32 0.0, %v2141
    %2143 = vmatmul.f32.gmra.mxu0 %v159
    %v2144 = vpop.f32.mrf.mxu0
    %v2145 = vadd.f32 0.0, %v2144
    %2146 = vdwg.mxu0
    %v2147 = vmul.f32 %v1194, %v2136
    %v2148 = vmul.f32 %v1194, %v2139
    %v2149 = vmul.f32 %v1194, %v2142
    %v2150 = vmul.f32 %v1194, %v2145
    %v2151 = vadd.f32 %v1208, %v2147
    %v2152 = vadd.f32 %v1209, %v2148
    %v2153 = vadd.f32 %v1210, %v2149
    %v2154 = vadd.f32 %v1211, %v2150
    %s2155 = scalar_lea.vmem [#allocation9], 32
    %2156 = vst.msk [vmem:[%s2155] sm:$0xff] %vm164, %v2151
    %2157 = vst.msk [vmem:[%s2155 + $0x8] sm:$0xff] %vm164, %v2152
    %2158 = vst.msk [vmem:[%s2155 + $0x10] sm:$0xff] %vm164, %v2153
    %2159 = vst.msk [vmem:[%s2155 + $0x18] sm:$0xff] %vm164, %v2154
    // Predicated region
    $region66: #{tpu_custom_call.1} parent=1 // pred_check
      _
    $region67: #{tpu_custom_call.1} parent=1 // pred_check_branch
      %2161 = sbr.rel (0) target = $region69
    $region68: #{tpu_custom_call.1} parent=1 // pred_region
      %2163 = vsyncadd [#allocation5], 0
      %s2164 = sshll.u32 [#allocation9], 4
      %s2165 = int_to_ptr.vmem [resolvable:$true] %s2164
      %s2166 = sshll.u32 %s13, 4
      %s2167 = int_to_ptr.hbm [resolvable:$true] %s2166
      %2172 = dma.vmem_to_hbm [thread:$0]  %s2165, 1024, %s2167, [#allocation5], 128, 128, 8
    $region69: #{tpu_custom_call.1} parent=1 // pred_fallthru
      _
    // Predicated region
    $region70: #{tpu_custom_call.1} parent=1 // pred_check
      _
    $region71: #{tpu_custom_call.1} parent=1 // pred_check_branch
      %2174 = sbr.rel (0) target = $region73
    $region72: #{tpu_custom_call.1} parent=1 // pred_region
      %2176 = dma.done [#allocation5], 1024
    $region73: #{tpu_custom_call.1} parent=1 // pred_fallthru
      _
    %2177 = vsyncpa [#allocation4], 1
    %2178 = vsyncpa [#allocation7], 1
    %2179 = vsyncpa [#allocation5], 1

</llo_original>
